<compile_context>
chip_gen: v6e
topology: v6e:2x2x1
jax: 0.10.0
libtpu: 0.0.40
codegen_flags: <defaults>
</compile_context>

<pallas_src>
import functools

import jax
import jax.numpy as jnp
from jax.experimental import pallas as pl
from jax.experimental.pallas import tpu as pltpu


# ----------------------------------------------------------------------------- helpers
def _round_up(x, m):
    return (x + m - 1) // m * m


def _vmem_capacity_bytes():
    # Chip-aware VMEM size (v5e/v6e: 128 MiB, v7x: 64 MiB/core). Fall back to
    # the smallest (v7x) figure if the query is unavailable.
    try:
        info = pltpu.get_tpu_info()
        cap = getattr(info, "vmem_capacity_bytes", None)
        if cap:
            return int(cap)
    except Exception:
        pass
    return 64 * 1024 * 1024


# ----------------------------------------------------------------------------- kernel
def _masked_softmax(logits, mask_row):
    # logits: (B, M, N) f32;  mask_row: (B, 1, N) {0,1} f32.
    # ESIM masked_softmax (softmax(logits*mask) -> re-mask -> renormalize by
    # sum + 1e-13), algebraically fused into one normalization:
    #   out_i = e_i*m_i / (sum_j e_j*m_j + 1e-13 * sum_j e_j)
    z = logits * mask_row
    z = z - jnp.max(z, axis=-1, keepdims=True)      # numerically stable
    e = jnp.exp(z)
    num = e * mask_row
    denom = (jnp.sum(num, axis=-1, keepdims=True)
             + 1e-13 * jnp.sum(e, axis=-1, keepdims=True))
    return num * pl.reciprocal(denom, approx=True)  # EUP slot, ~free vs VALU


def attn_kernel(p_ref, pm_row_ref, pm_col_ref, h_ref, hm_row_ref, hm_col_ref,
                wp_ref, wh_ref, *, matmul_dtype):
    P = p_ref[...].astype(matmul_dtype)      # (BBLK, Lp, D)
    H = h_ref[...].astype(matmul_dtype)      # (BBLK, Lh, D)
    pm_row = pm_row_ref[...]                 # (BBLK, 1, Lp) f32
    hm_row = hm_row_ref[...]                 # (BBLK, 1, Lh) f32
    pm_col = pm_col_ref[...]                 # (BBLK, Lp, 1) f32
    hm_col = hm_col_ref[...]                 # (BBLK, Lh, 1) f32

    # Similarity matrices on the MXU (bf16 feeds, f32 accumulation).  s_hp is
    # s_ph^T; recomputed because the kernel is HBM-bound at these shapes (the
    # extra matmul hides under the DMA) and it keeps the lowering to plain
    # rhs-transposed batched matmuls (no in-kernel relayout).
    s_ph = jnp.einsum('bpd,bhd->bph', P, H,
                      preferred_element_type=jnp.float32)   # (BBLK, Lp, Lh)
    s_hp = jnp.einsum('bhd,bpd->bhp', H, P,
                      preferred_element_type=jnp.float32)   # (BBLK, Lh, Lp)

    a_p = _masked_softmax(s_ph, hm_row)      # premise attends over hypothesis
    a_h = _masked_softmax(s_hp, pm_row)      # hypothesis attends over premise

    wp = jnp.einsum('bph,bhd->bpd', a_p.astype(matmul_dtype), H,
                    preferred_element_type=jnp.float32) * pm_col
    wh = jnp.einsum('bhp,bpd->bhd', a_h.astype(matmul_dtype), P,
                    preferred_element_type=jnp.float32) * hm_col

    wp_ref[...] = wp.astype(wp_ref.dtype)
    wh_ref[...] = wh.astype(wh_ref.dtype)


# ----------------------------------------------------------------------------- wrapper
def attn_pallas(encoded_premise, premise_mask, encoded_hypothesis, hypothesis_mask,
                *, matmul_dtype=jnp.bfloat16):
    B, Lp, D = encoded_premise.shape
    _, Lh, _ = encoded_hypothesis.shape
    out_dtype = encoded_premise.dtype

    # ---- lane-dense padding: last dims to multiples of 128 (zero masks). ----
    Dp = _round_up(D, 128)
    Lpp = _round_up(Lp, 128)
    Lhp = _round_up(Lh, 128)

    # ---- batch blocking: derive BBLK from a chip-aware VMEM budget. ---------
    vmem_cap = _vmem_capacity_bytes()
    vmem_limit = min(vmem_cap * 3 // 4, 96 * 1024 * 1024)
    blk_budget = vmem_limit // 2          # headroom for compiler temps / spills
    per_b = 4 * (4 * (Lpp + Lhp) * Dp     # in/out tiles, double-buffered
                 + 4 * Lpp * Lhp          # similarity / attention tiles (f32)
                 + 3 * (Lpp + Lhp) * Dp)  # misc temporaries (bf16 copies etc.)
    bblk = max(1, blk_budget // per_b)
    bblk = min(bblk, max(1, -(-B // 2)))  # keep >=2 grid steps for megacore/v7x
    Bp = _round_up(B, bblk)               # pad batch so grid divides evenly

    pm = premise_mask.astype(jnp.float32)
    hm = hypothesis_mask.astype(jnp.float32)

    p = jnp.pad(encoded_premise, ((0, Bp - B), (0, Lpp - Lp), (0, Dp - D)))
    h = jnp.pad(encoded_hypothesis, ((0, Bp - B), (0, Lhp - Lh), (0, Dp - D)))
    pm = jnp.pad(pm, ((0, Bp - B), (0, Lpp - Lp)))
    hm = jnp.pad(hm, ((0, Bp - B), (0, Lhp - Lh)))

    # Masks in both row- and column-broadcast orientations (no lane<->sublane
    # transpose of a mask vector inside the kernel).
    pm_row = pm.reshape(Bp, 1, Lpp)
    hm_row = hm.reshape(Bp, 1, Lhp)
    pm_col = pm.reshape(Bp, Lpp, 1)
    hm_col = hm.reshape(Bp, Lhp, 1)

    kernel = functools.partial(attn_kernel, matmul_dtype=matmul_dtype)

    grid_spec = pltpu.PrefetchScalarGridSpec(
        num_scalar_prefetch=0,
        grid=(Bp // bblk,),
        in_specs=[
            pl.BlockSpec((bblk, Lpp, Dp), lambda b: (b, 0, 0)),
            pl.BlockSpec((bblk, 1, Lpp), lambda b: (b, 0, 0)),
            pl.BlockSpec((bblk, Lpp, 1), lambda b: (b, 0, 0)),
            pl.BlockSpec((bblk, Lhp, Dp), lambda b: (b, 0, 0)),
            pl.BlockSpec((bblk, 1, Lhp), lambda b: (b, 0, 0)),
            pl.BlockSpec((bblk, Lhp, 1), lambda b: (b, 0, 0)),
        ],
        out_specs=[
            pl.BlockSpec((bblk, Lpp, Dp), lambda b: (b, 0, 0)),
            pl.BlockSpec((bblk, Lhp, Dp), lambda b: (b, 0, 0)),
        ],
    )

    wp, wh = pl.pallas_call(
        kernel,
        out_shape=(jax.ShapeDtypeStruct((Bp, Lpp, Dp), out_dtype),
                   jax.ShapeDtypeStruct((Bp, Lhp, Dp), out_dtype)),
        grid_spec=grid_spec,
        compiler_params=pltpu.CompilerParams(
            dimension_semantics=("parallel",),
            vmem_limit_bytes=vmem_limit),
    )(p, pm_row, pm_col, h, hm_row, hm_col)

    return wp[:B, :Lp, :D], wh[:B, :Lh, :D]


# ----------------------------------------------------------------------------- reference
def attn_reference(p, pm, h, hm, matmul_dtype=jnp.float32):
    # Pure-JAX mirror of the PyTorch forward. With matmul_dtype=float32 it is
    # the exact ESIM reference; with bfloat16 it matches the kernel's MXU-feed
    # precision (softmax still f32).
    pm = pm.astype(jnp.float32)
    hm = hm.astype(jnp.float32)
    pc = p.astype(matmul_dtype)
    hc = h.astype(matmul_dtype)
    s = jnp.einsum('bpd,bhd->bph', pc, hc, preferred_element_type=jnp.float32)

    def msoftmax(t, mask):
        m = mask[:, None, :]
        sm = jax.nn.softmax(t * m, axis=-1) * m
        return sm / (sm.sum(-1, keepdims=True) + 1e-13)

    a_p = msoftmax(s, hm)                           # (B, Lp, Lh)
    a_h = msoftmax(jnp.swapaxes(s, 1, 2), pm)       # (B, Lh, Lp)
    wp = jnp.einsum('bph,bhd->bpd', a_p.astype(matmul_dtype), hc,
                    preferred_element_type=jnp.float32) * pm[:, :, None]
    wh = jnp.einsum('bhp,bpd->bhd', a_h.astype(matmul_dtype), pc,
                    preferred_element_type=jnp.float32) * hm[:, :, None]
    return wp, wh


# ----------------------------------------------------------------------------- demo / check
if __name__ == "__main__":
    B, Lp, Lh, D = 2, 16, 8, 32
    key = jax.random.PRNGKey(0)
    kp, kh = jax.random.split(key)

    encoded_premise = jax.random.normal(kp, (B, Lp, D), dtype=jnp.float32)
    encoded_hypothesis = jax.random.normal(kh, (B, Lh, D), dtype=jnp.float32)

    # Variable-length {0,1} masks (valid prefix, padded suffix).
    prem_lens = jnp.array([16, 12])
    hyp_lens = jnp.array([8, 5])
    premise_mask = (jnp.arange(Lp)[None, :] < prem_lens[:, None]).astype(jnp.float32)
    hypothesis_mask = (jnp.arange(Lh)[None, :] < hyp_lens[:, None]).astype(jnp.float32)

    attn = jax.jit(attn_pallas)
    wp, wh = attn(encoded_premise, premise_mask,
                  encoded_hypothesis, hypothesis_mask)
    jax.block_until_ready((wp, wh))

    assert wp.shape == (B, Lp, D) and wh.shape == (B, Lh, D)

    # 1) Matched-precision reference (bf16 MXU feeds): isolates kernel-logic
    #    errors from the intentional precision changes.
    wp_m, wh_m = attn_reference(encoded_premise, premise_mask,
                                encoded_hypothesis, hypothesis_mask,
                                matmul_dtype=jnp.bfloat16)
    assert jnp.allclose(wp, wp_m, rtol=1e-2, atol=1e-2)
    assert jnp.allclose(wh, wh_m, rtol=1e-2, atol=1e-2)

    # 2) Exact f32 ESIM reference (mirrors the PyTorch module). Looser
    #    tolerance accounts for the bf16 matmul operands feeding exp().
    wp_f, wh_f = attn_reference(encoded_premise, premise_mask,
                                encoded_hypothesis, hypothesis_mask,
                                matmul_dtype=jnp.float32)
    assert jnp.allclose(wp, wp_f, rtol=5e-2, atol=5e-2)
    assert jnp.allclose(wh, wh_f, rtol=5e-2, atol=5e-2)

    print("KERNEL_OK")
</pallas_src>

<mosaic_0001>
module attributes {stable_mosaic.version = 11 : i64} {
  func.func @attn_kernel(%arg0: i32, %arg1: memref<1x128x128xf32, #tpu.memory_space<vmem>>, %arg2: memref<1x1x128xf32, #tpu.memory_space<vmem>>, %arg3: memref<1x128x1xf32, #tpu.memory_space<vmem>>, %arg4: memref<1x128x128xf32, #tpu.memory_space<vmem>>, %arg5: memref<1x1x128xf32, #tpu.memory_space<vmem>>, %arg6: memref<1x128x1xf32, #tpu.memory_space<vmem>>, %arg7: memref<1x128x128xf32, #tpu.memory_space<vmem>>, %arg8: memref<1x128x128xf32, #tpu.memory_space<vmem>>) attributes {dimension_semantics = [#tpu.dimension_semantics<parallel>], iteration_bounds = array<i64: 2>, scalar_prefetch = 0 : i64, scratch_operands = 0 : i64, tpu.core_type = #tpu.core_type<tc>, window_params = [{transform_indices = @transform_0, window_bounds = array<i64: 1, 128, 128>}, {transform_indices = @transform_1, window_bounds = array<i64: 1, 1, 128>}, {transform_indices = @transform_2, window_bounds = array<i64: 1, 128, 1>}, {transform_indices = @transform_3, window_bounds = array<i64: 1, 128, 128>}, {transform_indices = @transform_4, window_bounds = array<i64: 1, 1, 128>}, {transform_indices = @transform_5, window_bounds = array<i64: 1, 128, 1>}, {transform_indices = @transform_6, window_bounds = array<i64: 1, 128, 128>}, {transform_indices = @transform_7, window_bounds = array<i64: 1, 128, 128>}]} {
    %c0 = arith.constant 0 : index
    %c0_0 = arith.constant 0 : index
    %c0_1 = arith.constant 0 : index
    %0 = vector.load %arg1[%c0, %c0_0, %c0_1] : memref<1x128x128xf32, #tpu.memory_space<vmem>>, vector<1x128x128xf32>
    %1 = arith.truncf %0 : vector<1x128x128xf32> to vector<1x128x128xbf16>
    %c0_2 = arith.constant 0 : index
    %c0_3 = arith.constant 0 : index
    %c0_4 = arith.constant 0 : index
    %2 = vector.load %arg4[%c0_2, %c0_3, %c0_4] : memref<1x128x128xf32, #tpu.memory_space<vmem>>, vector<1x128x128xf32>
    %3 = arith.truncf %2 : vector<1x128x128xf32> to vector<1x128x128xbf16>
    %c0_5 = arith.constant 0 : index
    %c0_6 = arith.constant 0 : index
    %c0_7 = arith.constant 0 : index
    %4 = vector.load %arg2[%c0_5, %c0_6, %c0_7] : memref<1x1x128xf32, #tpu.memory_space<vmem>>, vector<1x1x128xf32>
    %c0_8 = arith.constant 0 : index
    %c0_9 = arith.constant 0 : index
    %c0_10 = arith.constant 0 : index
    %5 = vector.load %arg5[%c0_8, %c0_9, %c0_10] : memref<1x1x128xf32, #tpu.memory_space<vmem>>, vector<1x1x128xf32>
    %c0_11 = arith.constant 0 : index
    %c0_12 = arith.constant 0 : index
    %c0_13 = arith.constant 0 : index
    %6 = vector.load %arg3[%c0_11, %c0_12, %c0_13] : memref<1x128x1xf32, #tpu.memory_space<vmem>>, vector<1x128x1xf32>
    %c0_14 = arith.constant 0 : index
    %c0_15 = arith.constant 0 : index
    %c0_16 = arith.constant 0 : index
    %7 = vector.load %arg6[%c0_14, %c0_15, %c0_16] : memref<1x128x1xf32, #tpu.memory_space<vmem>>, vector<1x128x1xf32>
    "tpu.trace_start"() <{level = 10 : i32, message = "bpd,bhd->bph"}> : () -> ()
    %cst = arith.constant dense<0.000000e+00> : vector<1x128x128xf32>
    %8 = tpu.matmul %1, %3, %cst {dimension_numbers = #tpu.dot_dimension_numbers<[2], [2], [1], [1], [0, 0, 0, 1, 1, 1], [0], [0]>} : vector<1x128x128xbf16>, vector<1x128x128xbf16>, vector<1x128x128xf32> -> vector<1x128x128xf32>
    "tpu.trace_stop"() : () -> ()
    "tpu.trace_start"() <{level = 10 : i32, message = "bhd,bpd->bhp"}> : () -> ()
    %cst_17 = arith.constant dense<0.000000e+00> : vector<1x128x128xf32>
    %9 = tpu.matmul %3, %1, %cst_17 {dimension_numbers = #tpu.dot_dimension_numbers<[2], [2], [1], [1], [0, 0, 0, 1, 1, 1], [0], [0]>} : vector<1x128x128xbf16>, vector<1x128x128xbf16>, vector<1x128x128xf32> -> vector<1x128x128xf32>
    "tpu.trace_stop"() : () -> ()
    %10 = vector.broadcast %5 : vector<1x1x128xf32> to vector<1x128x128xf32>
    %11 = arith.mulf %8, %10 : vector<1x128x128xf32>
    %cst_18 = arith.constant dense<0xFF800000> : vector<1x128xf32>
    %12 = vector.multi_reduction <maximumf>, %11, %cst_18 [2] : vector<1x128x128xf32> to vector<1x128xf32>
    %13 = vector.shape_cast %12 : vector<1x128xf32> to vector<1x128x1xf32>
    %14 = vector.broadcast %13 : vector<1x128x1xf32> to vector<1x128x128xf32>
    %15 = arith.subf %11, %14 : vector<1x128x128xf32>
    %16 = math.exp %15 : vector<1x128x128xf32>
    %17 = vector.broadcast %5 : vector<1x1x128xf32> to vector<1x128x128xf32>
    %18 = arith.mulf %16, %17 : vector<1x128x128xf32>
    %cst_19 = arith.constant dense<0.000000e+00> : vector<1x128xf32>
    %19 = vector.multi_reduction <add>, %18, %cst_19 [2] : vector<1x128x128xf32> to vector<1x128xf32>
    %20 = vector.shape_cast %19 : vector<1x128xf32> to vector<1x128x1xf32>
    %cst_20 = arith.constant dense<0.000000e+00> : vector<1x128xf32>
    %21 = vector.multi_reduction <add>, %16, %cst_20 [2] : vector<1x128x128xf32> to vector<1x128xf32>
    %22 = vector.shape_cast %21 : vector<1x128xf32> to vector<1x128x1xf32>
    %cst_21 = arith.constant 9.99999982E-14 : f32
    %23 = vector.broadcast %cst_21 : f32 to vector<1x128x1xf32>
    %24 = arith.mulf %23, %22 : vector<1x128x1xf32>
    %25 = arith.addf %20, %24 : vector<1x128x1xf32>
    %26 = tpu.reciprocal %25 {approx = true} : vector<1x128x1xf32> -> vector<1x128x1xf32>
    %27 = vector.broadcast %26 : vector<1x128x1xf32> to vector<1x128x128xf32>
    %28 = arith.mulf %18, %27 : vector<1x128x128xf32>
    %29 = vector.broadcast %4 : vector<1x1x128xf32> to vector<1x128x128xf32>
    %30 = arith.mulf %9, %29 : vector<1x128x128xf32>
    %cst_22 = arith.constant dense<0xFF800000> : vector<1x128xf32>
    %31 = vector.multi_reduction <maximumf>, %30, %cst_22 [2] : vector<1x128x128xf32> to vector<1x128xf32>
    %32 = vector.shape_cast %31 : vector<1x128xf32> to vector<1x128x1xf32>
    %33 = vector.broadcast %32 : vector<1x128x1xf32> to vector<1x128x128xf32>
    %34 = arith.subf %30, %33 : vector<1x128x128xf32>
    %35 = math.exp %34 : vector<1x128x128xf32>
    %36 = vector.broadcast %4 : vector<1x1x128xf32> to vector<1x128x128xf32>
    %37 = arith.mulf %35, %36 : vector<1x128x128xf32>
    %cst_23 = arith.constant dense<0.000000e+00> : vector<1x128xf32>
    %38 = vector.multi_reduction <add>, %37, %cst_23 [2] : vector<1x128x128xf32> to vector<1x128xf32>
    %39 = vector.shape_cast %38 : vector<1x128xf32> to vector<1x128x1xf32>
    %cst_24 = arith.constant dense<0.000000e+00> : vector<1x128xf32>
    %40 = vector.multi_reduction <add>, %35, %cst_24 [2] : vector<1x128x128xf32> to vector<1x128xf32>
    %41 = vector.shape_cast %40 : vector<1x128xf32> to vector<1x128x1xf32>
    %cst_25 = arith.constant 9.99999982E-14 : f32
    %42 = vector.broadcast %cst_25 : f32 to vector<1x128x1xf32>
    %43 = arith.mulf %42, %41 : vector<1x128x1xf32>
    %44 = arith.addf %39, %43 : vector<1x128x1xf32>
    %45 = tpu.reciprocal %44 {approx = true} : vector<1x128x1xf32> -> vector<1x128x1xf32>
    %46 = vector.broadcast %45 : vector<1x128x1xf32> to vector<1x128x128xf32>
    %47 = arith.mulf %37, %46 : vector<1x128x128xf32>
    %48 = arith.truncf %28 : vector<1x128x128xf32> to vector<1x128x128xbf16>
    "tpu.trace_start"() <{level = 10 : i32, message = "bph,bhd->bpd"}> : () -> ()
    %cst_26 = arith.constant dense<0.000000e+00> : vector<1x128x128xf32>
    %49 = tpu.matmul %48, %3, %cst_26 {dimension_numbers = #tpu.dot_dimension_numbers<[2], [1], [1], [2], [0, 0, 0, 1, 1, 2], [0], [0]>} : vector<1x128x128xbf16>, vector<1x128x128xbf16>, vector<1x128x128xf32> -> vector<1x128x128xf32>
    "tpu.trace_stop"() : () -> ()
    %50 = vector.broadcast %6 : vector<1x128x1xf32> to vector<1x128x128xf32>
    %51 = arith.mulf %49, %50 : vector<1x128x128xf32>
    %52 = arith.truncf %47 : vector<1x128x128xf32> to vector<1x128x128xbf16>
    "tpu.trace_start"() <{level = 10 : i32, message = "bhp,bpd->bhd"}> : () -> ()
    %cst_27 = arith.constant dense<0.000000e+00> : vector<1x128x128xf32>
    %53 = tpu.matmul %52, %1, %cst_27 {dimension_numbers = #tpu.dot_dimension_numbers<[2], [1], [1], [2], [0, 0, 0, 1, 1, 2], [0], [0]>} : vector<1x128x128xbf16>, vector<1x128x128xbf16>, vector<1x128x128xf32> -> vector<1x128x128xf32>
    "tpu.trace_stop"() : () -> ()
    %54 = vector.broadcast %7 : vector<1x128x1xf32> to vector<1x128x128xf32>
    %55 = arith.mulf %53, %54 : vector<1x128x128xf32>
    %c0_28 = arith.constant 0 : index
    %c0_29 = arith.constant 0 : index
    %c0_30 = arith.constant 0 : index
    %56 = vector.load %arg7[%c0_28, %c0_29, %c0_30] : memref<1x128x128xf32, #tpu.memory_space<vmem>>, vector<1x128x128xf32>
    tpu.vector_store %arg7[%c0_28, %c0_29, %c0_30], %51 {strides = array<i32>} : memref<1x128x128xf32, #tpu.memory_space<vmem>>, vector<1x128x128xf32>,
    %c0_31 = arith.constant 0 : index
    %c0_32 = arith.constant 0 : index
    %c0_33 = arith.constant 0 : index
    %57 = vector.load %arg8[%c0_31, %c0_32, %c0_33] : memref<1x128x128xf32, #tpu.memory_space<vmem>>, vector<1x128x128xf32>
    tpu.vector_store %arg8[%c0_31, %c0_32, %c0_33], %55 {strides = array<i32>} : memref<1x128x128xf32, #tpu.memory_space<vmem>>, vector<1x128x128xf32>,
    return
  }
  func.func @transform_0(%arg0: i32) -> (i32, i32, i32) {
    %c0_i32 = arith.constant 0 : i32
    %c0_i32_0 = arith.constant 0 : i32
    %c0_i32_1 = arith.constant 0 : i32
    return %arg0, %c0_i32, %c0_i32_0 : i32, i32, i32
  }
  func.func @transform_1(%arg0: i32) -> (i32, i32, i32) {
    %c0_i32 = arith.constant 0 : i32
    %c0_i32_0 = arith.constant 0 : i32
    %c0_i32_1 = arith.constant 0 : i32
    return %arg0, %c0_i32, %c0_i32_0 : i32, i32, i32
  }
  func.func @transform_2(%arg0: i32) -> (i32, i32, i32) {
    %c0_i32 = arith.constant 0 : i32
    %c0_i32_0 = arith.constant 0 : i32
    %c0_i32_1 = arith.constant 0 : i32
    return %arg0, %c0_i32, %c0_i32_0 : i32, i32, i32
  }
  func.func @transform_3(%arg0: i32) -> (i32, i32, i32) {
    %c0_i32 = arith.constant 0 : i32
    %c0_i32_0 = arith.constant 0 : i32
    %c0_i32_1 = arith.constant 0 : i32
    return %arg0, %c0_i32, %c0_i32_0 : i32, i32, i32
  }
  func.func @transform_4(%arg0: i32) -> (i32, i32, i32) {
    %c0_i32 = arith.constant 0 : i32
    %c0_i32_0 = arith.constant 0 : i32
    %c0_i32_1 = arith.constant 0 : i32
    return %arg0, %c0_i32, %c0_i32_0 : i32, i32, i32
  }
  func.func @transform_5(%arg0: i32) -> (i32, i32, i32) {
    %c0_i32 = arith.constant 0 : i32
    %c0_i32_0 = arith.constant 0 : i32
    %c0_i32_1 = arith.constant 0 : i32
    return %arg0, %c0_i32, %c0_i32_0 : i32, i32, i32
  }
  func.func @transform_6(%arg0: i32) -> (i32, i32, i32) {
    %c0_i32 = arith.constant 0 : i32
    %c0_i32_0 = arith.constant 0 : i32
    %c0_i32_1 = arith.constant 0 : i32
    return %arg0, %c0_i32, %c0_i32_0 : i32, i32, i32
  }
  func.func @transform_7(%arg0: i32) -> (i32, i32, i32) {
    %c0_i32 = arith.constant 0 : i32
    %c0_i32_0 = arith.constant 0 : i32
    %c0_i32_1 = arith.constant 0 : i32
    return %arg0, %c0_i32, %c0_i32_0 : i32, i32, i32
  }
}

</mosaic_0001>

<llo_original>
// kernel: attn_pallas.1
$region0: #{attn_pallas.1}
  #allocation0 [shape = 'u32[]', space=smem, size = 0x4, offset = 0x4, fixed_abs, tag = 'smem constant byte address 0x4 - core index']
  #allocation1 [shape = 'u32[144,128]{1,0:T(1,128)}', space=vmem, size = 0x12000, scoped, tag = 'internal scratch']
  %s0 = inlined_call_operand.vmem [shape: f32[2,128,128], index: 0, kind: input, shape index: {}]
  %s1 = inlined_call_operand.vmem [shape: f32[2,1,128], index: 1, kind: input, shape index: {}]
  %s2 = inlined_call_operand.vmem [shape: f32[2,128,1], index: 2, kind: input, shape index: {}]
  %s3 = inlined_call_operand.vmem [shape: f32[2,128,128], index: 3, kind: input, shape index: {}]
  %s4 = inlined_call_operand.vmem [shape: f32[2,1,128], index: 4, kind: input, shape index: {}]
  %s5 = inlined_call_operand.vmem [shape: f32[2,128,1], index: 5, kind: input, shape index: {}]
  %s6 = inlined_call_operand.vmem [shape: f32[2,128,128], index: 6, kind: output, shape index: {0}]
  %s7 = inlined_call_operand.vmem [shape: f32[2,128,128], index: 7, kind: output, shape index: {1}]
  %8 = xla_tuple %s6, %s7
  %s9 = sld [smem:[#allocation0]]
  $region65: #{attn_pallas.1} parent=0
    _
  %s11 = ssub.s32 1, %s9
  %s12 = scalar_select 0, %s11, %s9
  loop: start=0, step=1, limit=4
  $region2: #{attn_pallas.1} parent=0 // loop_pre_header
    _
  $region3: #{attn_pallas.1} parent=0 // loop_header
    %s14 = sphi 0, %s18
    %p15 = scmp.ge.s32.totalorder %s14, 4
    %s24 = sphi 0, %s26
    %s27 = sphi 0, %s24
    %s28 = sphi 0, %s27
    %s44 = sphi 0, %s28
    %s50 = sphi 0, %s52
    %s53 = sphi 0, %s50
    %s54 = sphi 0, %s53
    %s70 = sphi 0, %s54
    %s76 = sphi 0, %s78
    %s79 = sphi 0, %s76
    %s80 = sphi 0, %s79
    %s96 = sphi 0, %s80
    %s102 = sphi 0, %s104
    %s105 = sphi 0, %s102
    %s106 = sphi 0, %s105
    %s122 = sphi 0, %s106
    %s128 = sphi 0, %s130
    %s131 = sphi 0, %s128
    %s132 = sphi 0, %s131
    %s148 = sphi 0, %s132
    %s154 = sphi 0, %s156
    %s157 = sphi 0, %s154
    %s158 = sphi 0, %s157
    %s174 = sphi 0, %s158
    %s180 = sphi 0, %s182
    %s183 = sphi 0, %s180
    %s184 = sphi 0, %s183
    %s200 = sphi 0, %s184
    %s206 = sphi 0, %s208
    %s209 = sphi 0, %s206
    %s210 = sphi 0, %s209
    %s226 = sphi 0, %s210
  $region4: #{attn_pallas.1} parent=0 // loop_header_branch
    %17 = sbr.rel (%p15) target = $region8
  $region5: #{attn_pallas.1} parent=0 // loop_body
    %s19 = ssub.s32 %s14, 1
    %s20 = ssub.s32 %s14, 2
    %s21 = sadd.s32 %s14, 1
    %s22 = ssub.s32 %s14, %s21
    %p23 = scmp.eq.s32.totalorder %s22, 0
    %s25 = sadd.s32 %s24, 1
    %s26 = scalar_select %p23, %s24, %s25
    %p29 = pneg %p23
    %p30 = scmp.eq.s32.totalorder %s14, 1
    %p31 = por %p29, %p30
    %p32 = scmp.ne.s32.totalorder %s24, %s27
    %p33 = scmp.eq.s32.totalorder %s14, 0
    %p34 = por %p32, %p33
    %p35 = scmp.ne.s32.totalorder %s24, %s27
    %p36 = scmp.eq.s32.totalorder %s19, 1
    %p37 = por %p35, %p36
    %p38 = scmp.ne.s32.totalorder %s27, %s28
    %p39 = scmp.eq.s32.totalorder %s19, 0
    %p40 = por %p38, %p39
    %p41 = scmp.ne.s32.totalorder %s27, %s28
    %p42 = scmp.eq.s32.totalorder %s20, 1
    %p43 = por %p41, %p42
    %p45 = scmp.ne.s32.totalorder %s28, %s44
    %p46 = scmp.eq.s32.totalorder %s20, 0
    %p47 = por %p45, %p46
    %s48 = ssub.s32 %s14, %s21
    %p49 = scmp.eq.s32.totalorder %s48, 0
    %s51 = sadd.s32 %s50, 1
    %s52 = scalar_select %p49, %s50, %s51
    %p55 = pneg %p49
    %p56 = scmp.eq.s32.totalorder %s14, 1
    %p57 = por %p55, %p56
    %p58 = scmp.ne.s32.totalorder %s50, %s53
    %p59 = scmp.eq.s32.totalorder %s14, 0
    %p60 = por %p58, %p59
    %p61 = scmp.ne.s32.totalorder %s50, %s53
    %p62 = scmp.eq.s32.totalorder %s19, 1
    %p63 = por %p61, %p62
    %p64 = scmp.ne.s32.totalorder %s53, %s54
    %p65 = scmp.eq.s32.totalorder %s19, 0
    %p66 = por %p64, %p65
    %p67 = scmp.ne.s32.totalorder %s53, %s54
    %p68 = scmp.eq.s32.totalorder %s20, 1
    %p69 = por %p67, %p68
    %p71 = scmp.ne.s32.totalorder %s54, %s70
    %p72 = scmp.eq.s32.totalorder %s20, 0
    %p73 = por %p71, %p72
    %s74 = ssub.s32 %s14, %s21
    %p75 = scmp.eq.s32.totalorder %s74, 0
    %s77 = sadd.s32 %s76, 1
    %s78 = scalar_select %p75, %s76, %s77
    %p81 = pneg %p75
    %p82 = scmp.eq.s32.totalorder %s14, 1
    %p83 = por %p81, %p82
    %p84 = scmp.ne.s32.totalorder %s76, %s79
    %p85 = scmp.eq.s32.totalorder %s14, 0
    %p86 = por %p84, %p85
    %p87 = scmp.ne.s32.totalorder %s76, %s79
    %p88 = scmp.eq.s32.totalorder %s19, 1
    %p89 = por %p87, %p88
    %p90 = scmp.ne.s32.totalorder %s79, %s80
    %p91 = scmp.eq.s32.totalorder %s19, 0
    %p92 = por %p90, %p91
    %p93 = scmp.ne.s32.totalorder %s79, %s80
    %p94 = scmp.eq.s32.totalorder %s20, 1
    %p95 = por %p93, %p94
    %p97 = scmp.ne.s32.totalorder %s80, %s96
    %p98 = scmp.eq.s32.totalorder %s20, 0
    %p99 = por %p97, %p98
    %s100 = ssub.s32 %s14, %s21
    %p101 = scmp.eq.s32.totalorder %s100, 0
    %s103 = sadd.s32 %s102, 1
    %s104 = scalar_select %p101, %s102, %s103
    %p107 = pneg %p101
    %p108 = scmp.eq.s32.totalorder %s14, 1
    %p109 = por %p107, %p108
    %p110 = scmp.ne.s32.totalorder %s102, %s105
    %p111 = scmp.eq.s32.totalorder %s14, 0
    %p112 = por %p110, %p111
    %p113 = scmp.ne.s32.totalorder %s102, %s105
    %p114 = scmp.eq.s32.totalorder %s19, 1
    %p115 = por %p113, %p114
    %p116 = scmp.ne.s32.totalorder %s105, %s106
    %p117 = scmp.eq.s32.totalorder %s19, 0
    %p118 = por %p116, %p117
    %p119 = scmp.ne.s32.totalorder %s105, %s106
    %p120 = scmp.eq.s32.totalorder %s20, 1
    %p121 = por %p119, %p120
    %p123 = scmp.ne.s32.totalorder %s106, %s122
    %p124 = scmp.eq.s32.totalorder %s20, 0
    %p125 = por %p123, %p124
    %s126 = ssub.s32 %s14, %s21
    %p127 = scmp.eq.s32.totalorder %s126, 0
    %s129 = sadd.s32 %s128, 1
    %s130 = scalar_select %p127, %s128, %s129
    %p133 = pneg %p127
    %p134 = scmp.eq.s32.totalorder %s14, 1
    %p135 = por %p133, %p134
    %p136 = scmp.ne.s32.totalorder %s128, %s131
    %p137 = scmp.eq.s32.totalorder %s14, 0
    %p138 = por %p136, %p137
    %p139 = scmp.ne.s32.totalorder %s128, %s131
    %p140 = scmp.eq.s32.totalorder %s19, 1
    %p141 = por %p139, %p140
    %p142 = scmp.ne.s32.totalorder %s131, %s132
    %p143 = scmp.eq.s32.totalorder %s19, 0
    %p144 = por %p142, %p143
    %p145 = scmp.ne.s32.totalorder %s131, %s132
    %p146 = scmp.eq.s32.totalorder %s20, 1
    %p147 = por %p145, %p146
    %p149 = scmp.ne.s32.totalorder %s132, %s148
    %p150 = scmp.eq.s32.totalorder %s20, 0
    %p151 = por %p149, %p150
    %s152 = ssub.s32 %s14, %s21
    %p153 = scmp.eq.s32.totalorder %s152, 0
    %s155 = sadd.s32 %s154, 1
    %s156 = scalar_select %p153, %s154, %s155
    %p159 = pneg %p153
    %p160 = scmp.eq.s32.totalorder %s14, 1
    %p161 = por %p159, %p160
    %p162 = scmp.ne.s32.totalorder %s154, %s157
    %p163 = scmp.eq.s32.totalorder %s14, 0
    %p164 = por %p162, %p163
    %p165 = scmp.ne.s32.totalorder %s154, %s157
    %p166 = scmp.eq.s32.totalorder %s19, 1
    %p167 = por %p165, %p166
    %p168 = scmp.ne.s32.totalorder %s157, %s158
    %p169 = scmp.eq.s32.totalorder %s19, 0
    %p170 = por %p168, %p169
    %p171 = scmp.ne.s32.totalorder %s157, %s158
    %p172 = scmp.eq.s32.totalorder %s20, 1
    %p173 = por %p171, %p172
    %p175 = scmp.ne.s32.totalorder %s158, %s174
    %p176 = scmp.eq.s32.totalorder %s20, 0
    %p177 = por %p175, %p176
    %s178 = ssub.s32 %s14, %s21
    %p179 = scmp.eq.s32.totalorder %s178, 0
    %s181 = sadd.s32 %s180, 1
    %s182 = scalar_select %p179, %s180, %s181
    %p185 = pneg %p179
    %p186 = scmp.eq.s32.totalorder %s14, 1
    %p187 = por %p185, %p186
    %p188 = scmp.ne.s32.totalorder %s180, %s183
    %p189 = scmp.eq.s32.totalorder %s14, 0
    %p190 = por %p188, %p189
    %p191 = scmp.ne.s32.totalorder %s180, %s183
    %p192 = scmp.eq.s32.totalorder %s19, 1
    %p193 = por %p191, %p192
    %p194 = scmp.ne.s32.totalorder %s183, %s184
    %p195 = scmp.eq.s32.totalorder %s19, 0
    %p196 = por %p194, %p195
    %p197 = scmp.ne.s32.totalorder %s183, %s184
    %p198 = scmp.eq.s32.totalorder %s20, 1
    %p199 = por %p197, %p198
    %p201 = scmp.ne.s32.totalorder %s184, %s200
    %p202 = scmp.eq.s32.totalorder %s20, 0
    %p203 = por %p201, %p202
    %s204 = ssub.s32 %s14, %s21
    %p205 = scmp.eq.s32.totalorder %s204, 0
    %s207 = sadd.s32 %s206, 1
    %s208 = scalar_select %p205, %s206, %s207
    %p211 = pneg %p205
    %p212 = scmp.eq.s32.totalorder %s14, 1
    %p213 = por %p211, %p212
    %p214 = scmp.ne.s32.totalorder %s206, %s209
    %p215 = scmp.eq.s32.totalorder %s14, 0
    %p216 = por %p214, %p215
    %p217 = scmp.ne.s32.totalorder %s206, %s209
    %p218 = scmp.eq.s32.totalorder %s19, 1
    %p219 = por %p217, %p218
    %p220 = scmp.ne.s32.totalorder %s209, %s210
    %p221 = scmp.eq.s32.totalorder %s19, 0
    %p222 = por %p220, %p221
    %p223 = scmp.ne.s32.totalorder %s209, %s210
    %p224 = scmp.eq.s32.totalorder %s20, 1
    %p225 = por %p223, %p224
    %p227 = scmp.ne.s32.totalorder %s210, %s226
    %p228 = scmp.eq.s32.totalorder %s20, 0
    %p229 = por %p227, %p228
    %p230 = scmp.le.s32.totalorder 1, %s14
    %p231 = scmp.lt.s32.totalorder %s14, 3
    %p232 = pnand %p230, %p231
    %p233 = pneg %p232
    // Predicated region
    $region9: #{attn_pallas.1} parent=5 // pred_check
      _
    $region10: #{attn_pallas.1} parent=5 // pred_check_branch
      %235 = sbr.rel (%p232) target = $region12
    $region11: #{attn_pallas.1} parent=5 // pred_region
      %s236 = ssub.s32 %s14, 1
    $region12: #{attn_pallas.1} parent=5 // pred_fallthru
      _
    %p237 = scmp.lt.s32.totalorder %s14, 2
    // Predicated region
    $region13: #{attn_pallas.1} parent=5 // pred_check
      %p238 = pneg %p237
    $region14: #{attn_pallas.1} parent=5 // pred_check_branch
      %240 = sbr.rel (%p238) target = $region16
    $region15: #{attn_pallas.1} parent=5 // pred_region
      // Predicated region
      $region17: #{attn_pallas.1} parent=15 // pred_check
        %p241 = pneg %p34
      $region18: #{attn_pallas.1} parent=15 // pred_check_branch
        %243 = sbr.rel (%p241) target = $region20
      $region19: #{attn_pallas.1} parent=15 // pred_region
        %p244 = scmp.lt.s32.totalorder %s14, 1
        %s245 = scalar_select %p244, %s14, 1
        %s246 = smul.addr %s245, 16
        %s247 = smul.addr %s246, 8
        %s248 = scalar_lea.vmem %s0, %s247
      $region20: #{attn_pallas.1} parent=15 // pred_fallthru
        _
      // Predicated region
      $region21: #{attn_pallas.1} parent=15 // pred_check
        %p249 = pneg %p60
      $region22: #{attn_pallas.1} parent=15 // pred_check_branch
        %251 = sbr.rel (%p249) target = $region24
      $region23: #{attn_pallas.1} parent=15 // pred_region
        %p252 = scmp.lt.s32.totalorder %s14, 1
        %s253 = scalar_select %p252, %s14, 1
        %s254 = scalar_lea.vmem %s1, %s253
      $region24: #{attn_pallas.1} parent=15 // pred_fallthru
        _
      // Predicated region
      $region25: #{attn_pallas.1} parent=15 // pred_check
        %p255 = pneg %p86
      $region26: #{attn_pallas.1} parent=15 // pred_check_branch
        %257 = sbr.rel (%p255) target = $region28
      $region27: #{attn_pallas.1} parent=15 // pred_region
        %p258 = scmp.lt.s32.totalorder %s14, 1
        %s259 = scalar_select %p258, %s14, 1
        %s260 = smul.addr %s259, 16
        %s261 = smul.addr %s260, 8
        %s262 = scalar_lea.vmem %s2, %s261
      $region28: #{attn_pallas.1} parent=15 // pred_fallthru
        _
      // Predicated region
      $region29: #{attn_pallas.1} parent=15 // pred_check
        %p263 = pneg %p112
      $region30: #{attn_pallas.1} parent=15 // pred_check_branch
        %265 = sbr.rel (%p263) target = $region32
      $region31: #{attn_pallas.1} parent=15 // pred_region
        %p266 = scmp.lt.s32.totalorder %s14, 1
        %s267 = scalar_select %p266, %s14, 1
        %s268 = smul.addr %s267, 16
        %s269 = smul.addr %s268, 8
        %s270 = scalar_lea.vmem %s3, %s269
      $region32: #{attn_pallas.1} parent=15 // pred_fallthru
        _
      // Predicated region
      $region33: #{attn_pallas.1} parent=15 // pred_check
        %p271 = pneg %p138
      $region34: #{attn_pallas.1} parent=15 // pred_check_branch
        %273 = sbr.rel (%p271) target = $region36
      $region35: #{attn_pallas.1} parent=15 // pred_region
        %p274 = scmp.lt.s32.totalorder %s14, 1
        %s275 = scalar_select %p274, %s14, 1
        %s276 = scalar_lea.vmem %s4, %s275
      $region36: #{attn_pallas.1} parent=15 // pred_fallthru
        _
      // Predicated region
      $region37: #{attn_pallas.1} parent=15 // pred_check
        %p277 = pneg %p164
      $region38: #{attn_pallas.1} parent=15 // pred_check_branch
        %279 = sbr.rel (%p277) target = $region40
      $region39: #{attn_pallas.1} parent=15 // pred_region
        %p280 = scmp.lt.s32.totalorder %s14, 1
        %s281 = scalar_select %p280, %s14, 1
        %s282 = smul.addr %s281, 16
        %s283 = smul.addr %s282, 8
        %s284 = scalar_lea.vmem %s5, %s283
      $region40: #{attn_pallas.1} parent=15 // pred_fallthru
        _
    $region16: #{attn_pallas.1} parent=5 // pred_fallthru
      _
    %p285 = scmp.le.s32.totalorder 1, %s14
    %p286 = scmp.lt.s32.totalorder %s14, 3
    %p287 = pnand %p285, %p286
    %p288 = pneg %p287
    // Predicated region
    $region41: #{attn_pallas.1} parent=5 // pred_check
      _
    $region42: #{attn_pallas.1} parent=5 // pred_check_branch
      %290 = sbr.rel (%p287) target = $region44
    $region43: #{attn_pallas.1} parent=5 // pred_region
      %s291 = ssub.s32 %s14, 1
      %p292 = scmp.lt.s32.totalorder %s19, 1
      %s293 = scalar_select %p292, %s19, 1
      %s294 = smul.addr %s293, 16
      %s295 = smul.addr %s294, 8
      %s296 = scalar_lea.vmem %s0, %s295
      %p297 = pneg %p40
      %p298 = pneg %p37
      %p299 = scmp.lt.s32.totalorder %s19, 1
      %s300 = scalar_select %p299, %s19, 1
      %s301 = scalar_lea.vmem %s1, %s300
      %p302 = pneg %p66
      %p303 = pneg %p63
      %p304 = scmp.lt.s32.totalorder %s19, 1
      %s305 = scalar_select %p304, %s19, 1
      %s306 = smul.addr %s305, 16
      %s307 = smul.addr %s306, 8
      %s308 = scalar_lea.vmem %s2, %s307
      %p309 = pneg %p92
      %p310 = pneg %p89
      %p311 = scmp.lt.s32.totalorder %s19, 1
      %s312 = scalar_select %p311, %s19, 1
      %s313 = smul.addr %s312, 16
      %s314 = smul.addr %s313, 8
      %s315 = scalar_lea.vmem %s3, %s314
      %p316 = pneg %p118
      %p317 = pneg %p115
      %p318 = scmp.lt.s32.totalorder %s19, 1
      %s319 = scalar_select %p318, %s19, 1
      %s320 = scalar_lea.vmem %s4, %s319
      %p321 = pneg %p144
      %p322 = pneg %p141
      %p323 = scmp.lt.s32.totalorder %s19, 1
      %s324 = scalar_select %p323, %s19, 1
      %s325 = smul.addr %s324, 16
      %s326 = smul.addr %s325, 8
      %s327 = scalar_lea.vmem %s5, %s326
      %p328 = pneg %p170
      %p329 = pneg %p167
      %p330 = pneg %p196
      %p331 = pneg %p193
      %p332 = scmp.lt.s32.totalorder %s19, 1
      %s333 = scalar_select %p332, %s19, 1
      %s334 = smul.addr %s333, 16
      %s335 = smul.addr %s334, 8
      %s336 = scalar_lea.vmem %s6, %s335
      %p337 = pneg %p222
      %p338 = pneg %p219
      %p339 = scmp.lt.s32.totalorder %s19, 1
      %s340 = scalar_select %p339, %s19, 1
      %s341 = smul.addr %s340, 16
      %s342 = smul.addr %s341, 8
      %s343 = scalar_lea.vmem %s7, %s342
      %p344 = scmp.lt.s32.totalorder %s19, 1
      %s345 = scalar_select %p344, %s19, 1
      %s346 = smul.addr %s345, 16
      %s347 = smul.addr %s346, 8
      %s348 = scalar_lea.vmem %s0, %s347
      %p349 = scmp.lt.s32.totalorder %s19, 1
      %s350 = scalar_select %p349, %s19, 1
      %s351 = scalar_lea.vmem %s1, %s350
      %p352 = scmp.lt.s32.totalorder %s19, 1
      %s353 = scalar_select %p352, %s19, 1
      %s354 = smul.addr %s353, 16
      %s355 = smul.addr %s354, 8
      %s356 = scalar_lea.vmem %s2, %s355
      %p357 = scmp.lt.s32.totalorder %s19, 1
      %s358 = scalar_select %p357, %s19, 1
      %s359 = smul.addr %s358, 16
      %s360 = smul.addr %s359, 8
      %s361 = scalar_lea.vmem %s3, %s360
      %p362 = scmp.lt.s32.totalorder %s19, 1
      %s363 = scalar_select %p362, %s19, 1
      %s364 = scalar_lea.vmem %s4, %s363
      %p365 = scmp.lt.s32.totalorder %s19, 1
      %s366 = scalar_select %p365, %s19, 1
      %s367 = smul.addr %s366, 16
      %s368 = smul.addr %s367, 8
      %s369 = scalar_lea.vmem %s5, %s368
      %p370 = scmp.lt.s32.totalorder %s19, 1
      %s371 = scalar_select %p370, %s19, 1
      %s372 = smul.addr %s371, 16
      %s373 = smul.addr %s372, 8
      %s374 = scalar_lea.vmem %s6, %s373
      %p375 = scmp.lt.s32.totalorder %s19, 1
      %s376 = scalar_select %p375, %s19, 1
      %s377 = smul.addr %s376, 16
      %s378 = smul.addr %s377, 8
      %s379 = scalar_lea.vmem %s7, %s378
      %v381 = vld [vmem:[%s348] sm:$0xff]
      %v382 = vld [vmem:[%s348 + $0x8] sm:$0xff]
      %v383 = vld [vmem:[%s348 + $0x10] sm:$0xff]
      %v384 = vld [vmem:[%s348 + $0x18] sm:$0xff]
      %v385 = vld [vmem:[%s348 + $0x20] sm:$0xff]
      %v386 = vld [vmem:[%s348 + $0x28] sm:$0xff]
      %v387 = vld [vmem:[%s348 + $0x30] sm:$0xff]
      %v388 = vld [vmem:[%s348 + $0x38] sm:$0xff]
      %v389 = vld [vmem:[%s348 + $0x40] sm:$0xff]
      %v390 = vld [vmem:[%s348 + $0x48] sm:$0xff]
      %v391 = vld [vmem:[%s348 + $0x50] sm:$0xff]
      %v392 = vld [vmem:[%s348 + $0x58] sm:$0xff]
      %v393 = vld [vmem:[%s348 + $0x60] sm:$0xff]
      %v394 = vld [vmem:[%s348 + $0x68] sm:$0xff]
      %v395 = vld [vmem:[%s348 + $0x70] sm:$0xff]
      %v396 = vld [vmem:[%s348 + $0x78] sm:$0xff]
      %v397 = vpack.c.bf16 %v382, %v381
      %v398 = vpack.c.bf16 %v384, %v383
      %v399 = vpack.c.bf16 %v386, %v385
      %v400 = vpack.c.bf16 %v388, %v387
      %v401 = vpack.c.bf16 %v390, %v389
      %v402 = vpack.c.bf16 %v392, %v391
      %v403 = vpack.c.bf16 %v394, %v393
      %v404 = vpack.c.bf16 %v396, %v395
      %v405 = vld [vmem:[%s361] sm:$0xff]
      %v406 = vld [vmem:[%s361 + $0x8] sm:$0xff]
      %v407 = vld [vmem:[%s361 + $0x10] sm:$0xff]
      %v408 = vld [vmem:[%s361 + $0x18] sm:$0xff]
      %v409 = vld [vmem:[%s361 + $0x20] sm:$0xff]
      %v410 = vld [vmem:[%s361 + $0x28] sm:$0xff]
      %v411 = vld [vmem:[%s361 + $0x30] sm:$0xff]
      %v412 = vld [vmem:[%s361 + $0x38] sm:$0xff]
      %v413 = vld [vmem:[%s361 + $0x40] sm:$0xff]
      %v414 = vld [vmem:[%s361 + $0x48] sm:$0xff]
      %v415 = vld [vmem:[%s361 + $0x50] sm:$0xff]
      %v416 = vld [vmem:[%s361 + $0x58] sm:$0xff]
      %v417 = vld [vmem:[%s361 + $0x60] sm:$0xff]
      %v418 = vld [vmem:[%s361 + $0x68] sm:$0xff]
      %v419 = vld [vmem:[%s361 + $0x70] sm:$0xff]
      %v420 = vld [vmem:[%s361 + $0x78] sm:$0xff]
      %v421 = vpack.c.bf16 %v406, %v405
      %v422 = vpack.c.bf16 %v408, %v407
      %v423 = vpack.c.bf16 %v410, %v409
      %v424 = vpack.c.bf16 %v412, %v411
      %v425 = vpack.c.bf16 %v414, %v413
      %v426 = vpack.c.bf16 %v416, %v415
      %v427 = vpack.c.bf16 %v418, %v417
      %v428 = vpack.c.bf16 %v420, %v419
      %v429 = vld [vmem:[%s351] sm:$0x1]
      %v430 = vld [vmem:[%s364] sm:$0x1]
      %v431 = vld [vmem:[%s356] sm:$0xff]
      %v432 = vld [vmem:[%s356 + $0x8] sm:$0xff]
      %v433 = vld [vmem:[%s356 + $0x10] sm:$0xff]
      %v434 = vld [vmem:[%s356 + $0x18] sm:$0xff]
      %v435 = vld [vmem:[%s356 + $0x20] sm:$0xff]
      %v436 = vld [vmem:[%s356 + $0x28] sm:$0xff]
      %v437 = vld [vmem:[%s356 + $0x30] sm:$0xff]
      %v438 = vld [vmem:[%s356 + $0x38] sm:$0xff]
      %v439 = vld [vmem:[%s356 + $0x40] sm:$0xff]
      %v440 = vld [vmem:[%s356 + $0x48] sm:$0xff]
      %v441 = vld [vmem:[%s356 + $0x50] sm:$0xff]
      %v442 = vld [vmem:[%s356 + $0x58] sm:$0xff]
      %v443 = vld [vmem:[%s356 + $0x60] sm:$0xff]
      %v444 = vld [vmem:[%s356 + $0x68] sm:$0xff]
      %v445 = vld [vmem:[%s356 + $0x70] sm:$0xff]
      %v446 = vld [vmem:[%s356 + $0x78] sm:$0xff]
      %v447 = vld [vmem:[%s369] sm:$0xff]
      %v448 = vld [vmem:[%s369 + $0x8] sm:$0xff]
      %v449 = vld [vmem:[%s369 + $0x10] sm:$0xff]
      %v450 = vld [vmem:[%s369 + $0x18] sm:$0xff]
      %v451 = vld [vmem:[%s369 + $0x20] sm:$0xff]
      %v452 = vld [vmem:[%s369 + $0x28] sm:$0xff]
      %v453 = vld [vmem:[%s369 + $0x30] sm:$0xff]
      %v454 = vld [vmem:[%s369 + $0x38] sm:$0xff]
      %v455 = vld [vmem:[%s369 + $0x40] sm:$0xff]
      %v456 = vld [vmem:[%s369 + $0x48] sm:$0xff]
      %v457 = vld [vmem:[%s369 + $0x50] sm:$0xff]
      %v458 = vld [vmem:[%s369 + $0x58] sm:$0xff]
      %v459 = vld [vmem:[%s369 + $0x60] sm:$0xff]
      %v460 = vld [vmem:[%s369 + $0x68] sm:$0xff]
      %v461 = vld [vmem:[%s369 + $0x70] sm:$0xff]
      %v462 = vld [vmem:[%s369 + $0x78] sm:$0xff]
      %463 = vmatprep.subr.bf16.mxu0 0
      %464 = vmatpush1.bf16.xpose.msra.mxu0 %v428
      %465 = vmatprep.subr.bf16.mxu0 0
      %466 = vmatpush1.bf16.xpose.msra.mxu0 %v427
      %467 = vmatprep.subr.bf16.mxu0 0
      %468 = vmatpush1.bf16.xpose.msra.mxu0 %v426
      %469 = vmatprep.subr.bf16.mxu0 0
      %470 = vmatpush1.bf16.xpose.msra.mxu0 %v425
      %471 = vmatprep.subr.bf16.mxu0 0
      %472 = vmatpush1.bf16.xpose.msra.mxu0 %v424
      %473 = vmatprep.subr.bf16.mxu0 0
      %474 = vmatpush1.bf16.xpose.msra.mxu0 %v423
      %475 = vmatprep.subr.bf16.mxu0 0
      %476 = vmatpush1.bf16.xpose.msra.mxu0 %v422
      %477 = vmatprep.subr.bf16.mxu0 0
      %478 = vmatpush1.bf16.xpose.msra.mxu0 %v421
      %479 = vmatprep.subr.bf16.mxu0 0
      %480 = vmatpush2.bf16.xpose.msra.mxu0 0
      %481 = vmatprep.subr.bf16.mxu0 0
      %482 = vmatpush2.bf16.xpose.msra.mxu0 0
      %483 = vmatprep.subr.bf16.mxu0 0
      %484 = vmatpush2.bf16.xpose.msra.mxu0 0
      %485 = vmatprep.subr.bf16.mxu0 0
      %486 = vmatpush2.bf16.xpose.msra.mxu0 0
      %487 = vmatprep.subr.bf16.mxu0 0
      %488 = vmatpush2.bf16.xpose.msra.mxu0 0
      %489 = vmatprep.subr.bf16.mxu0 0
      %490 = vmatpush2.bf16.xpose.msra.mxu0 0
      %491 = vmatprep.subr.bf16.mxu0 0
      %492 = vmatpush2.bf16.xpose.msra.mxu0 0
      %493 = vmatprep.subr.bf16.mxu0 0
      %494 = vmatpush2.bf16.xpose.msra.mxu0 0
      %495 = vmatprep.mubr.bf16.mxu0 0
      %496 = vmatmul.mubr.bf16.gmra.mxu0 %v397
      %v497 = vpop.f32.mrf.mxu0
      %v498 = vadd.f32 0.0, %v497
      %v499 = vpop.f32.mrf.mxu0
      %v500 = vpop.f32.mrf.mxu0
      %v501 = vadd.f32 0.0, %v500
      %v502 = vpop.f32.mrf.mxu0
      %503 = vmatprep.mubr.bf16.mxu0 0
      %504 = vmatmul.mubr.bf16.gmra.mxu0 %v398
      %v505 = vpop.f32.mrf.mxu0
      %v506 = vadd.f32 0.0, %v505
      %v507 = vpop.f32.mrf.mxu0
      %v508 = vpop.f32.mrf.mxu0
      %v509 = vadd.f32 0.0, %v508
      %v510 = vpop.f32.mrf.mxu0
      %511 = vmatprep.mubr.bf16.mxu0 0
      %512 = vmatmul.mubr.bf16.gmra.mxu0 %v399
      %v513 = vpop.f32.mrf.mxu0
      %v514 = vadd.f32 0.0, %v513
      %v515 = vpop.f32.mrf.mxu0
      %v516 = vpop.f32.mrf.mxu0
      %v517 = vadd.f32 0.0, %v516
      %v518 = vpop.f32.mrf.mxu0
      %519 = vmatprep.mubr.bf16.mxu0 0
      %520 = vmatmul.mubr.bf16.gmra.mxu0 %v400
      %v521 = vpop.f32.mrf.mxu0
      %v522 = vadd.f32 0.0, %v521
      %v523 = vpop.f32.mrf.mxu0
      %v524 = vpop.f32.mrf.mxu0
      %v525 = vadd.f32 0.0, %v524
      %v526 = vpop.f32.mrf.mxu0
      %527 = vmatprep.mubr.bf16.mxu0 0
      %528 = vmatmul.mubr.bf16.gmra.mxu0 %v401
      %v529 = vpop.f32.mrf.mxu0
      %v530 = vadd.f32 0.0, %v529
      %v531 = vpop.f32.mrf.mxu0
      %v532 = vpop.f32.mrf.mxu0
      %v533 = vadd.f32 0.0, %v532
      %v534 = vpop.f32.mrf.mxu0
      %535 = vmatprep.mubr.bf16.mxu0 0
      %536 = vmatmul.mubr.bf16.gmra.mxu0 %v402
      %v537 = vpop.f32.mrf.mxu0
      %v538 = vadd.f32 0.0, %v537
      %v539 = vpop.f32.mrf.mxu0
      %v540 = vpop.f32.mrf.mxu0
      %v541 = vadd.f32 0.0, %v540
      %v542 = vpop.f32.mrf.mxu0
      %543 = vmatprep.mubr.bf16.mxu0 0
      %544 = vmatmul.mubr.bf16.gmra.mxu0 %v403
      %v545 = vpop.f32.mrf.mxu0
      %v546 = vadd.f32 0.0, %v545
      %v547 = vpop.f32.mrf.mxu0
      %v548 = vpop.f32.mrf.mxu0
      %v549 = vadd.f32 0.0, %v548
      %v550 = vpop.f32.mrf.mxu0
      %551 = vmatprep.mubr.bf16.mxu0 0
      %552 = vmatmul.mubr.bf16.gmra.mxu0 %v404
      %v553 = vpop.f32.mrf.mxu0
      %v554 = vadd.f32 0.0, %v553
      %v555 = vpop.f32.mrf.mxu0
      %v556 = vpop.f32.mrf.mxu0
      %v557 = vadd.f32 0.0, %v556
      %v558 = vpop.f32.mrf.mxu0
      %559 = vdwg.mxu0
      %560 = vmatprep.subr.bf16.mxu0 0
      %561 = vmatpush1.bf16.xpose.msra.mxu0 %v404
      %562 = vmatprep.subr.bf16.mxu0 0
      %563 = vmatpush1.bf16.xpose.msra.mxu0 %v403
      %564 = vmatprep.subr.bf16.mxu0 0
      %565 = vmatpush1.bf16.xpose.msra.mxu0 %v402
      %566 = vmatprep.subr.bf16.mxu0 0
      %567 = vmatpush1.bf16.xpose.msra.mxu0 %v401
      %568 = vmatprep.subr.bf16.mxu0 0
      %569 = vmatpush1.bf16.xpose.msra.mxu0 %v400
      %570 = vmatprep.subr.bf16.mxu0 0
      %571 = vmatpush1.bf16.xpose.msra.mxu0 %v399
      %572 = vmatprep.subr.bf16.mxu0 0
      %573 = vmatpush1.bf16.xpose.msra.mxu0 %v398
      %574 = vmatprep.subr.bf16.mxu0 0
      %575 = vmatpush1.bf16.xpose.msra.mxu0 %v397
      %576 = vmatprep.subr.bf16.mxu0 0
      %577 = vmatpush2.bf16.xpose.msra.mxu0 0
      %578 = vmatprep.subr.bf16.mxu0 0
      %579 = vmatpush2.bf16.xpose.msra.mxu0 0
      %580 = vmatprep.subr.bf16.mxu0 0
      %581 = vmatpush2.bf16.xpose.msra.mxu0 0
      %582 = vmatprep.subr.bf16.mxu0 0
      %583 = vmatpush2.bf16.xpose.msra.mxu0 0
      %584 = vmatprep.subr.bf16.mxu0 0
      %585 = vmatpush2.bf16.xpose.msra.mxu0 0
      %586 = vmatprep.subr.bf16.mxu0 0
      %587 = vmatpush2.bf16.xpose.msra.mxu0 0
      %588 = vmatprep.subr.bf16.mxu0 0
      %589 = vmatpush2.bf16.xpose.msra.mxu0 0
      %590 = vmatprep.subr.bf16.mxu0 0
      %591 = vmatpush2.bf16.xpose.msra.mxu0 0
      %592 = vmatprep.mubr.bf16.mxu0 0
      %593 = vmatmul.mubr.bf16.gmra.mxu0 %v421
      %v594 = vpop.f32.mrf.mxu0
      %v595 = vadd.f32 0.0, %v594
      %v596 = vpop.f32.mrf.mxu0
      %v597 = vpop.f32.mrf.mxu0
      %v598 = vadd.f32 0.0, %v597
      %v599 = vpop.f32.mrf.mxu0
      %600 = vmatprep.mubr.bf16.mxu0 0
      %601 = vmatmul.mubr.bf16.gmra.mxu0 %v422
      %v602 = vpop.f32.mrf.mxu0
      %v603 = vadd.f32 0.0, %v602
      %v604 = vpop.f32.mrf.mxu0
      %v605 = vpop.f32.mrf.mxu0
      %v606 = vadd.f32 0.0, %v605
      %v607 = vpop.f32.mrf.mxu0
      %608 = vmatprep.mubr.bf16.mxu0 0
      %609 = vmatmul.mubr.bf16.gmra.mxu0 %v423
      %v610 = vpop.f32.mrf.mxu0
      %v611 = vadd.f32 0.0, %v610
      %v612 = vpop.f32.mrf.mxu0
      %v613 = vpop.f32.mrf.mxu0
      %v614 = vadd.f32 0.0, %v613
      %v615 = vpop.f32.mrf.mxu0
      %616 = vmatprep.mubr.bf16.mxu0 0
      %617 = vmatmul.mubr.bf16.gmra.mxu0 %v424
      %v618 = vpop.f32.mrf.mxu0
      %v619 = vadd.f32 0.0, %v618
      %v620 = vpop.f32.mrf.mxu0
      %v621 = vpop.f32.mrf.mxu0
      %v622 = vadd.f32 0.0, %v621
      %v623 = vpop.f32.mrf.mxu0
      %624 = vmatprep.mubr.bf16.mxu0 0
      %625 = vmatmul.mubr.bf16.gmra.mxu0 %v425
      %v626 = vpop.f32.mrf.mxu0
      %v627 = vadd.f32 0.0, %v626
      %v628 = vpop.f32.mrf.mxu0
      %v629 = vpop.f32.mrf.mxu0
      %v630 = vadd.f32 0.0, %v629
      %v631 = vpop.f32.mrf.mxu0
      %632 = vmatprep.mubr.bf16.mxu0 0
      %633 = vmatmul.mubr.bf16.gmra.mxu0 %v426
      %v634 = vpop.f32.mrf.mxu0
      %v635 = vadd.f32 0.0, %v634
      %v636 = vpop.f32.mrf.mxu0
      %v637 = vpop.f32.mrf.mxu0
      %v638 = vadd.f32 0.0, %v637
      %v639 = vpop.f32.mrf.mxu0
      %640 = vmatprep.mubr.bf16.mxu0 0
      %641 = vmatmul.mubr.bf16.gmra.mxu0 %v427
      %v642 = vpop.f32.mrf.mxu0
      %v643 = vadd.f32 0.0, %v642
      %v644 = vpop.f32.mrf.mxu0
      %v645 = vpop.f32.mrf.mxu0
      %v646 = vadd.f32 0.0, %v645
      %v647 = vpop.f32.mrf.mxu0
      %648 = vmatprep.mubr.bf16.mxu0 0
      %649 = vmatmul.mubr.bf16.gmra.mxu0 %v428
      %v650 = vpop.f32.mrf.mxu0
      %v651 = vadd.f32 0.0, %v650
      %v652 = vpop.f32.mrf.mxu0
      %v653 = vpop.f32.mrf.mxu0
      %v654 = vadd.f32 0.0, %v653
      %v655 = vpop.f32.mrf.mxu0
      %656 = vdwg.mxu0
      %v658 = vlaneseq
      %v659 = vshrl.u32 %v658, 7
      %v660 = vsub.s32 0, %v659
      %v661 = vrot.slane %v430, %v660
      %v663 = vmul.f32 %v498, %v661
      %v664 = vmul.f32 %v501, %v661
      %v665 = vmul.f32 %v506, %v661
      %v666 = vmul.f32 %v509, %v661
      %v667 = vmul.f32 %v514, %v661
      %v668 = vmul.f32 %v517, %v661
      %v669 = vmul.f32 %v522, %v661
      %v670 = vmul.f32 %v525, %v661
      %v671 = vmul.f32 %v530, %v661
      %v672 = vmul.f32 %v533, %v661
      %v673 = vmul.f32 %v538, %v661
      %v674 = vmul.f32 %v541, %v661
      %v675 = vmul.f32 %v546, %v661
      %v676 = vmul.f32 %v549, %v661
      %v677 = vmul.f32 %v554, %v661
      %v678 = vmul.f32 %v557, %v661
      %679 = vmax.xlane.f32.xlu0 %v663
      %v680 = vpop.xlane.xlu0 %679
      %681 = vmax.xlane.f32.xlu0 %v664
      %v682 = vpop.xlane.xlu0 %681
      %683 = vmax.xlane.f32.xlu0 %v665
      %v684 = vpop.xlane.xlu0 %683
      %685 = vmax.xlane.f32.xlu0 %v666
      %v686 = vpop.xlane.xlu0 %685
      %687 = vmax.xlane.f32.xlu0 %v667
      %v688 = vpop.xlane.xlu0 %687
      %689 = vmax.xlane.f32.xlu0 %v668
      %v690 = vpop.xlane.xlu0 %689
      %691 = vmax.xlane.f32.xlu0 %v669
      %v692 = vpop.xlane.xlu0 %691
      %693 = vmax.xlane.f32.xlu0 %v670
      %v694 = vpop.xlane.xlu0 %693
      %695 = vmax.xlane.f32.xlu0 %v671
      %v696 = vpop.xlane.xlu0 %695
      %697 = vmax.xlane.f32.xlu0 %v672
      %v698 = vpop.xlane.xlu0 %697
      %699 = vmax.xlane.f32.xlu0 %v673
      %v700 = vpop.xlane.xlu0 %699
      %701 = vmax.xlane.f32.xlu0 %v674
      %v702 = vpop.xlane.xlu0 %701
      %703 = vmax.xlane.f32.xlu0 %v675
      %v704 = vpop.xlane.xlu0 %703
      %705 = vmax.xlane.f32.xlu0 %v676
      %v706 = vpop.xlane.xlu0 %705
      %707 = vmax.xlane.f32.xlu0 %v677
      %v708 = vpop.xlane.xlu0 %707
      %709 = vmax.xlane.f32.xlu0 %v678
      %v710 = vpop.xlane.xlu0 %709
      %v711 = vsub.f32 %v663, %v680
      %v712 = vsub.f32 %v664, %v682
      %v713 = vsub.f32 %v665, %v684
      %v714 = vsub.f32 %v666, %v686
      %v715 = vsub.f32 %v667, %v688
      %v716 = vsub.f32 %v668, %v690
      %v717 = vsub.f32 %v669, %v692
      %v718 = vsub.f32 %v670, %v694
      %v719 = vsub.f32 %v671, %v696
      %v720 = vsub.f32 %v672, %v698
      %v721 = vsub.f32 %v673, %v700
      %v722 = vsub.f32 %v674, %v702
      %v723 = vsub.f32 %v675, %v704
      %v724 = vsub.f32 %v676, %v706
      %v725 = vsub.f32 %v677, %v708
      %v726 = vsub.f32 %v678, %v710
      %v727 = vmul.f32 %v711, 1.442695
      %v728 = vpow.pop %v727
      %v729 = vmul.f32 %v712, 1.442695
      %v730 = vpow.pop %v729
      %v731 = vmul.f32 %v713, 1.442695
      %v732 = vpow.pop %v731
      %v733 = vmul.f32 %v714, 1.442695
      %v734 = vpow.pop %v733
      %v735 = vmul.f32 %v715, 1.442695
      %v736 = vpow.pop %v735
      %v737 = vmul.f32 %v716, 1.442695
      %v738 = vpow.pop %v737
      %v739 = vmul.f32 %v717, 1.442695
      %v740 = vpow.pop %v739
      %v741 = vmul.f32 %v718, 1.442695
      %v742 = vpow.pop %v741
      %v743 = vmul.f32 %v719, 1.442695
      %v744 = vpow.pop %v743
      %v745 = vmul.f32 %v720, 1.442695
      %v746 = vpow.pop %v745
      %v747 = vmul.f32 %v721, 1.442695
      %v748 = vpow.pop %v747
      %v749 = vmul.f32 %v722, 1.442695
      %v750 = vpow.pop %v749
      %v751 = vmul.f32 %v723, 1.442695
      %v752 = vpow.pop %v751
      %v753 = vmul.f32 %v724, 1.442695
      %v754 = vpow.pop %v753
      %v755 = vmul.f32 %v725, 1.442695
      %v756 = vpow.pop %v755
      %v757 = vmul.f32 %v726, 1.442695
      %v758 = vpow.pop %v757
      %v759 = vmul.f32 %v728, %v661
      %v760 = vmul.f32 %v730, %v661
      %v761 = vmul.f32 %v732, %v661
      %v762 = vmul.f32 %v734, %v661
      %v763 = vmul.f32 %v736, %v661
      %v764 = vmul.f32 %v738, %v661
      %v765 = vmul.f32 %v740, %v661
      %v766 = vmul.f32 %v742, %v661
      %v767 = vmul.f32 %v744, %v661
      %v768 = vmul.f32 %v746, %v661
      %v769 = vmul.f32 %v748, %v661
      %v770 = vmul.f32 %v750, %v661
      %v771 = vmul.f32 %v752, %v661
      %v772 = vmul.f32 %v754, %v661
      %v773 = vmul.f32 %v756, %v661
      %v774 = vmul.f32 %v758, %v661
      %775 = vadd.xlane.f32.xlu0 %v759
      %v776 = vpop.xlane.xlu0 %775
      %777 = vadd.xlane.f32.xlu0 %v760
      %v778 = vpop.xlane.xlu0 %777
      %779 = vadd.xlane.f32.xlu0 %v761
      %v780 = vpop.xlane.xlu0 %779
      %781 = vadd.xlane.f32.xlu0 %v762
      %v782 = vpop.xlane.xlu0 %781
      %783 = vadd.xlane.f32.xlu0 %v763
      %v784 = vpop.xlane.xlu0 %783
      %785 = vadd.xlane.f32.xlu0 %v764
      %v786 = vpop.xlane.xlu0 %785
      %787 = vadd.xlane.f32.xlu0 %v765
      %v788 = vpop.xlane.xlu0 %787
      %789 = vadd.xlane.f32.xlu0 %v766
      %v790 = vpop.xlane.xlu0 %789
      %791 = vadd.xlane.f32.xlu0 %v767
      %v792 = vpop.xlane.xlu0 %791
      %793 = vadd.xlane.f32.xlu0 %v768
      %v794 = vpop.xlane.xlu0 %793
      %795 = vadd.xlane.f32.xlu0 %v769
      %v796 = vpop.xlane.xlu0 %795
      %797 = vadd.xlane.f32.xlu0 %v770
      %v798 = vpop.xlane.xlu0 %797
      %799 = vadd.xlane.f32.xlu0 %v771
      %v800 = vpop.xlane.xlu0 %799
      %801 = vadd.xlane.f32.xlu0 %v772
      %v802 = vpop.xlane.xlu0 %801
      %803 = vadd.xlane.f32.xlu0 %v773
      %v804 = vpop.xlane.xlu0 %803
      %805 = vadd.xlane.f32.xlu0 %v774
      %v806 = vpop.xlane.xlu0 %805
      %807 = vadd.xlane.f32.xlu0 %v728
      %v808 = vpop.xlane.xlu0 %807
      %809 = vadd.xlane.f32.xlu0 %v730
      %v810 = vpop.xlane.xlu0 %809
      %811 = vadd.xlane.f32.xlu0 %v732
      %v812 = vpop.xlane.xlu0 %811
      %813 = vadd.xlane.f32.xlu0 %v734
      %v814 = vpop.xlane.xlu0 %813
      %815 = vadd.xlane.f32.xlu0 %v736
      %v816 = vpop.xlane.xlu0 %815
      %817 = vadd.xlane.f32.xlu0 %v738
      %v818 = vpop.xlane.xlu0 %817
      %819 = vadd.xlane.f32.xlu0 %v740
      %v820 = vpop.xlane.xlu0 %819
      %821 = vadd.xlane.f32.xlu0 %v742
      %v822 = vpop.xlane.xlu0 %821
      %823 = vadd.xlane.f32.xlu0 %v744
      %v824 = vpop.xlane.xlu0 %823
      %825 = vadd.xlane.f32.xlu0 %v746
      %v826 = vpop.xlane.xlu0 %825
      %827 = vadd.xlane.f32.xlu0 %v748
      %v828 = vpop.xlane.xlu0 %827
      %829 = vadd.xlane.f32.xlu0 %v750
      %v830 = vpop.xlane.xlu0 %829
      %831 = vadd.xlane.f32.xlu0 %v752
      %v832 = vpop.xlane.xlu0 %831
      %833 = vadd.xlane.f32.xlu0 %v754
      %v834 = vpop.xlane.xlu0 %833
      %835 = vadd.xlane.f32.xlu0 %v756
      %v836 = vpop.xlane.xlu0 %835
      %837 = vadd.xlane.f32.xlu0 %v758
      %v838 = vpop.xlane.xlu0 %837
      %v839 = vmul.f32 %v808, 1e-13
      %v840 = vmul.f32 %v810, 1e-13
      %v841 = vmul.f32 %v812, 1e-13
      %v842 = vmul.f32 %v814, 1e-13
      %v843 = vmul.f32 %v816, 1e-13
      %v844 = vmul.f32 %v818, 1e-13
      %v845 = vmul.f32 %v820, 1e-13
      %v846 = vmul.f32 %v822, 1e-13
      %v847 = vmul.f32 %v824, 1e-13
      %v848 = vmul.f32 %v826, 1e-13
      %v849 = vmul.f32 %v828, 1e-13
      %v850 = vmul.f32 %v830, 1e-13
      %v851 = vmul.f32 %v832, 1e-13
      %v852 = vmul.f32 %v834, 1e-13
      %v853 = vmul.f32 %v836, 1e-13
      %v854 = vmul.f32 %v838, 1e-13
      %v855 = vadd.f32 %v776, %v839
      %v856 = vadd.f32 %v778, %v840
      %v857 = vadd.f32 %v780, %v841
      %v858 = vadd.f32 %v782, %v842
      %v859 = vadd.f32 %v784, %v843
      %v860 = vadd.f32 %v786, %v844
      %v861 = vadd.f32 %v788, %v845
      %v862 = vadd.f32 %v790, %v846
      %v863 = vadd.f32 %v792, %v847
      %v864 = vadd.f32 %v794, %v848
      %v865 = vadd.f32 %v796, %v849
      %v866 = vadd.f32 %v798, %v850
      %v867 = vadd.f32 %v800, %v851
      %v868 = vadd.f32 %v802, %v852
      %v869 = vadd.f32 %v804, %v853
      %v870 = vadd.f32 %v806, %v854
      %v871 = vrcp.pop %v855
      %v872 = vrcp.pop %v856
      %v873 = vrcp.pop %v857
      %v874 = vrcp.pop %v858
      %v875 = vrcp.pop %v859
      %v876 = vrcp.pop %v860
      %v877 = vrcp.pop %v861
      %v878 = vrcp.pop %v862
      %v879 = vrcp.pop %v863
      %v880 = vrcp.pop %v864
      %v881 = vrcp.pop %v865
      %v882 = vrcp.pop %v866
      %v883 = vrcp.pop %v867
      %v884 = vrcp.pop %v868
      %v885 = vrcp.pop %v869
      %v886 = vrcp.pop %v870
      %v887 = vmul.f32 %v759, %v871
      %v888 = vmul.f32 %v760, %v872
      %v889 = vmul.f32 %v761, %v873
      %v890 = vmul.f32 %v762, %v874
      %v891 = vmul.f32 %v763, %v875
      %v892 = vmul.f32 %v764, %v876
      %v893 = vmul.f32 %v765, %v877
      %v894 = vmul.f32 %v766, %v878
      %v895 = vmul.f32 %v767, %v879
      %v896 = vmul.f32 %v768, %v880
      %v897 = vmul.f32 %v769, %v881
      %v898 = vmul.f32 %v770, %v882
      %v899 = vmul.f32 %v771, %v883
      %v900 = vmul.f32 %v772, %v884
      %v901 = vmul.f32 %v773, %v885
      %v902 = vmul.f32 %v774, %v886
      %v904 = vlaneseq
      %v905 = vshrl.u32 %v904, 7
      %v906 = vsub.s32 0, %v905
      %v907 = vrot.slane %v429, %v906
      %v909 = vmul.f32 %v595, %v907
      %v910 = vmul.f32 %v598, %v907
      %v911 = vmul.f32 %v603, %v907
      %v912 = vmul.f32 %v606, %v907
      %v913 = vmul.f32 %v611, %v907
      %v914 = vmul.f32 %v614, %v907
      %v915 = vmul.f32 %v619, %v907
      %v916 = vmul.f32 %v622, %v907
      %v917 = vmul.f32 %v627, %v907
      %v918 = vmul.f32 %v630, %v907
      %v919 = vmul.f32 %v635, %v907
      %v920 = vmul.f32 %v638, %v907
      %v921 = vmul.f32 %v643, %v907
      %v922 = vmul.f32 %v646, %v907
      %v923 = vmul.f32 %v651, %v907
      %v924 = vmul.f32 %v654, %v907
      %925 = vmax.xlane.f32.xlu0 %v909
      %v926 = vpop.xlane.xlu0 %925
      %927 = vmax.xlane.f32.xlu0 %v910
      %v928 = vpop.xlane.xlu0 %927
      %929 = vmax.xlane.f32.xlu0 %v911
      %v930 = vpop.xlane.xlu0 %929
      %931 = vmax.xlane.f32.xlu0 %v912
      %v932 = vpop.xlane.xlu0 %931
      %933 = vmax.xlane.f32.xlu0 %v913
      %v934 = vpop.xlane.xlu0 %933
      %935 = vmax.xlane.f32.xlu0 %v914
      %v936 = vpop.xlane.xlu0 %935
      %937 = vmax.xlane.f32.xlu0 %v915
      %v938 = vpop.xlane.xlu0 %937
      %939 = vmax.xlane.f32.xlu0 %v916
      %v940 = vpop.xlane.xlu0 %939
      %941 = vmax.xlane.f32.xlu0 %v917
      %v942 = vpop.xlane.xlu0 %941
      %943 = vmax.xlane.f32.xlu0 %v918
      %v944 = vpop.xlane.xlu0 %943
      %945 = vmax.xlane.f32.xlu0 %v919
      %v946 = vpop.xlane.xlu0 %945
      %947 = vmax.xlane.f32.xlu0 %v920
      %v948 = vpop.xlane.xlu0 %947
      %949 = vmax.xlane.f32.xlu0 %v921
      %v950 = vpop.xlane.xlu0 %949
      %951 = vmax.xlane.f32.xlu0 %v922
      %v952 = vpop.xlane.xlu0 %951
      %953 = vmax.xlane.f32.xlu0 %v923
      %v954 = vpop.xlane.xlu0 %953
      %955 = vmax.xlane.f32.xlu0 %v924
      %v956 = vpop.xlane.xlu0 %955
      %v957 = vsub.f32 %v909, %v926
      %v958 = vsub.f32 %v910, %v928
      %v959 = vsub.f32 %v911, %v930
      %v960 = vsub.f32 %v912, %v932
      %v961 = vsub.f32 %v913, %v934
      %v962 = vsub.f32 %v914, %v936
      %v963 = vsub.f32 %v915, %v938
      %v964 = vsub.f32 %v916, %v940
      %v965 = vsub.f32 %v917, %v942
      %v966 = vsub.f32 %v918, %v944
      %v967 = vsub.f32 %v919, %v946
      %v968 = vsub.f32 %v920, %v948
      %v969 = vsub.f32 %v921, %v950
      %v970 = vsub.f32 %v922, %v952
      %v971 = vsub.f32 %v923, %v954
      %v972 = vsub.f32 %v924, %v956
      %v973 = vmul.f32 %v957, 1.442695
      %v974 = vpow.pop %v973
      %v975 = vmul.f32 %v958, 1.442695
      %v976 = vpow.pop %v975
      %v977 = vmul.f32 %v959, 1.442695
      %v978 = vpow.pop %v977
      %v979 = vmul.f32 %v960, 1.442695
      %v980 = vpow.pop %v979
      %v981 = vmul.f32 %v961, 1.442695
      %v982 = vpow.pop %v981
      %v983 = vmul.f32 %v962, 1.442695
      %v984 = vpow.pop %v983
      %v985 = vmul.f32 %v963, 1.442695
      %v986 = vpow.pop %v985
      %v987 = vmul.f32 %v964, 1.442695
      %v988 = vpow.pop %v987
      %v989 = vmul.f32 %v965, 1.442695
      %v990 = vpow.pop %v989
      %v991 = vmul.f32 %v966, 1.442695
      %v992 = vpow.pop %v991
      %v993 = vmul.f32 %v967, 1.442695
      %v994 = vpow.pop %v993
      %v995 = vmul.f32 %v968, 1.442695
      %v996 = vpow.pop %v995
      %v997 = vmul.f32 %v969, 1.442695
      %v998 = vpow.pop %v997
      %v999 = vmul.f32 %v970, 1.442695
      %v1000 = vpow.pop %v999
      %v1001 = vmul.f32 %v971, 1.442695
      %v1002 = vpow.pop %v1001
      %v1003 = vmul.f32 %v972, 1.442695
      %v1004 = vpow.pop %v1003
      %v1005 = vmul.f32 %v974, %v907
      %v1006 = vmul.f32 %v976, %v907
      %v1007 = vmul.f32 %v978, %v907
      %v1008 = vmul.f32 %v980, %v907
      %v1009 = vmul.f32 %v982, %v907
      %v1010 = vmul.f32 %v984, %v907
      %v1011 = vmul.f32 %v986, %v907
      %v1012 = vmul.f32 %v988, %v907
      %v1013 = vmul.f32 %v990, %v907
      %v1014 = vmul.f32 %v992, %v907
      %v1015 = vmul.f32 %v994, %v907
      %v1016 = vmul.f32 %v996, %v907
      %v1017 = vmul.f32 %v998, %v907
      %v1018 = vmul.f32 %v1000, %v907
      %v1019 = vmul.f32 %v1002, %v907
      %v1020 = vmul.f32 %v1004, %v907
      %1021 = vadd.xlane.f32.xlu0 %v1005
      %v1022 = vpop.xlane.xlu0 %1021
      %1023 = vadd.xlane.f32.xlu0 %v1006
      %v1024 = vpop.xlane.xlu0 %1023
      %1025 = vadd.xlane.f32.xlu0 %v1007
      %v1026 = vpop.xlane.xlu0 %1025
      %1027 = vadd.xlane.f32.xlu0 %v1008
      %v1028 = vpop.xlane.xlu0 %1027
      %1029 = vadd.xlane.f32.xlu0 %v1009
      %v1030 = vpop.xlane.xlu0 %1029
      %1031 = vadd.xlane.f32.xlu0 %v1010
      %v1032 = vpop.xlane.xlu0 %1031
      %1033 = vadd.xlane.f32.xlu0 %v1011
      %v1034 = vpop.xlane.xlu0 %1033
      %1035 = vadd.xlane.f32.xlu0 %v1012
      %v1036 = vpop.xlane.xlu0 %1035
      %1037 = vadd.xlane.f32.xlu0 %v1013
      %v1038 = vpop.xlane.xlu0 %1037
      %1039 = vadd.xlane.f32.xlu0 %v1014
      %v1040 = vpop.xlane.xlu0 %1039
      %1041 = vadd.xlane.f32.xlu0 %v1015
      %v1042 = vpop.xlane.xlu0 %1041
      %1043 = vadd.xlane.f32.xlu0 %v1016
      %v1044 = vpop.xlane.xlu0 %1043
      %1045 = vadd.xlane.f32.xlu0 %v1017
      %v1046 = vpop.xlane.xlu0 %1045
      %1047 = vadd.xlane.f32.xlu0 %v1018
      %v1048 = vpop.xlane.xlu0 %1047
      %1049 = vadd.xlane.f32.xlu0 %v1019
      %v1050 = vpop.xlane.xlu0 %1049
      %1051 = vadd.xlane.f32.xlu0 %v1020
      %v1052 = vpop.xlane.xlu0 %1051
      %1053 = vadd.xlane.f32.xlu0 %v974
      %v1054 = vpop.xlane.xlu0 %1053
      %1055 = vadd.xlane.f32.xlu0 %v976
      %v1056 = vpop.xlane.xlu0 %1055
      %1057 = vadd.xlane.f32.xlu0 %v978
      %v1058 = vpop.xlane.xlu0 %1057
      %1059 = vadd.xlane.f32.xlu0 %v980
      %v1060 = vpop.xlane.xlu0 %1059
      %1061 = vadd.xlane.f32.xlu0 %v982
      %v1062 = vpop.xlane.xlu0 %1061
      %1063 = vadd.xlane.f32.xlu0 %v984
      %v1064 = vpop.xlane.xlu0 %1063
      %1065 = vadd.xlane.f32.xlu0 %v986
      %v1066 = vpop.xlane.xlu0 %1065
      %1067 = vadd.xlane.f32.xlu0 %v988
      %v1068 = vpop.xlane.xlu0 %1067
      %1069 = vadd.xlane.f32.xlu0 %v990
      %v1070 = vpop.xlane.xlu0 %1069
      %1071 = vadd.xlane.f32.xlu0 %v992
      %v1072 = vpop.xlane.xlu0 %1071
      %1073 = vadd.xlane.f32.xlu0 %v994
      %v1074 = vpop.xlane.xlu0 %1073
      %1075 = vadd.xlane.f32.xlu0 %v996
      %v1076 = vpop.xlane.xlu0 %1075
      %1077 = vadd.xlane.f32.xlu0 %v998
      %v1078 = vpop.xlane.xlu0 %1077
      %1079 = vadd.xlane.f32.xlu0 %v1000
      %v1080 = vpop.xlane.xlu0 %1079
      %1081 = vadd.xlane.f32.xlu0 %v1002
      %v1082 = vpop.xlane.xlu0 %1081
      %1083 = vadd.xlane.f32.xlu0 %v1004
      %v1084 = vpop.xlane.xlu0 %1083
      %v1085 = vmul.f32 %v1054, 1e-13
      %v1086 = vmul.f32 %v1056, 1e-13
      %v1087 = vmul.f32 %v1058, 1e-13
      %v1088 = vmul.f32 %v1060, 1e-13
      %v1089 = vmul.f32 %v1062, 1e-13
      %v1090 = vmul.f32 %v1064, 1e-13
      %v1091 = vmul.f32 %v1066, 1e-13
      %v1092 = vmul.f32 %v1068, 1e-13
      %v1093 = vmul.f32 %v1070, 1e-13
      %v1094 = vmul.f32 %v1072, 1e-13
      %v1095 = vmul.f32 %v1074, 1e-13
      %v1096 = vmul.f32 %v1076, 1e-13
      %v1097 = vmul.f32 %v1078, 1e-13
      %v1098 = vmul.f32 %v1080, 1e-13
      %v1099 = vmul.f32 %v1082, 1e-13
      %v1100 = vmul.f32 %v1084, 1e-13
      %v1101 = vadd.f32 %v1022, %v1085
      %v1102 = vadd.f32 %v1024, %v1086
      %v1103 = vadd.f32 %v1026, %v1087
      %v1104 = vadd.f32 %v1028, %v1088
      %v1105 = vadd.f32 %v1030, %v1089
      %v1106 = vadd.f32 %v1032, %v1090
      %v1107 = vadd.f32 %v1034, %v1091
      %v1108 = vadd.f32 %v1036, %v1092
      %v1109 = vadd.f32 %v1038, %v1093
      %v1110 = vadd.f32 %v1040, %v1094
      %v1111 = vadd.f32 %v1042, %v1095
      %v1112 = vadd.f32 %v1044, %v1096
      %v1113 = vadd.f32 %v1046, %v1097
      %v1114 = vadd.f32 %v1048, %v1098
      %v1115 = vadd.f32 %v1050, %v1099
      %v1116 = vadd.f32 %v1052, %v1100
      %v1117 = vrcp.pop %v1101
      %v1118 = vrcp.pop %v1102
      %v1119 = vrcp.pop %v1103
      %v1120 = vrcp.pop %v1104
      %v1121 = vrcp.pop %v1105
      %v1122 = vrcp.pop %v1106
      %v1123 = vrcp.pop %v1107
      %v1124 = vrcp.pop %v1108
      %v1125 = vrcp.pop %v1109
      %v1126 = vrcp.pop %v1110
      %v1127 = vrcp.pop %v1111
      %v1128 = vrcp.pop %v1112
      %v1129 = vrcp.pop %v1113
      %v1130 = vrcp.pop %v1114
      %v1131 = vrcp.pop %v1115
      %v1132 = vrcp.pop %v1116
      %v1133 = vmul.f32 %v1005, %v1117
      %v1134 = vmul.f32 %v1006, %v1118
      %v1135 = vmul.f32 %v1007, %v1119
      %v1136 = vmul.f32 %v1008, %v1120
      %v1137 = vmul.f32 %v1009, %v1121
      %v1138 = vmul.f32 %v1010, %v1122
      %v1139 = vmul.f32 %v1011, %v1123
      %v1140 = vmul.f32 %v1012, %v1124
      %v1141 = vmul.f32 %v1013, %v1125
      %v1142 = vmul.f32 %v1014, %v1126
      %v1143 = vmul.f32 %v1015, %v1127
      %v1144 = vmul.f32 %v1016, %v1128
      %v1145 = vmul.f32 %v1017, %v1129
      %v1146 = vmul.f32 %v1018, %v1130
      %v1147 = vmul.f32 %v1019, %v1131
      %v1148 = vmul.f32 %v1020, %v1132
      %v1149 = vpack.c.bf16 %v888, %v887
      %v1150 = vpack.c.bf16 %v890, %v889
      %v1151 = vpack.c.bf16 %v892, %v891
      %v1152 = vpack.c.bf16 %v894, %v893
      %v1153 = vpack.c.bf16 %v896, %v895
      %v1154 = vpack.c.bf16 %v898, %v897
      %v1155 = vpack.c.bf16 %v900, %v899
      %v1156 = vpack.c.bf16 %v902, %v901
      %1157 = vmatprep.subr.bf16.mxu0 0
      %1158 = vmatpush1.bf16.msra.mxu0 %v428
      %1159 = vmatprep.subr.bf16.mxu0 0
      %1160 = vmatpush1.bf16.msra.mxu0 %v427
      %1161 = vmatprep.subr.bf16.mxu0 0
      %1162 = vmatpush1.bf16.msra.mxu0 %v426
      %1163 = vmatprep.subr.bf16.mxu0 0
      %1164 = vmatpush1.bf16.msra.mxu0 %v425
      %1165 = vmatprep.subr.bf16.mxu0 0
      %1166 = vmatpush1.bf16.msra.mxu0 %v424
      %1167 = vmatprep.subr.bf16.mxu0 0
      %1168 = vmatpush1.bf16.msra.mxu0 %v423
      %1169 = vmatprep.subr.bf16.mxu0 0
      %1170 = vmatpush1.bf16.msra.mxu0 %v422
      %1171 = vmatprep.subr.bf16.mxu0 0
      %1172 = vmatpush1.bf16.msra.mxu0 %v421
      %1173 = vmatprep.subr.bf16.mxu0 0
      %1174 = vmatpush2.bf16.msra.mxu0 0
      %1175 = vmatprep.subr.bf16.mxu0 0
      %1176 = vmatpush2.bf16.msra.mxu0 0
      %1177 = vmatprep.subr.bf16.mxu0 0
      %1178 = vmatpush2.bf16.msra.mxu0 0
      %1179 = vmatprep.subr.bf16.mxu0 0
      %1180 = vmatpush2.bf16.msra.mxu0 0
      %1181 = vmatprep.subr.bf16.mxu0 0
      %1182 = vmatpush2.bf16.msra.mxu0 0
      %1183 = vmatprep.subr.bf16.mxu0 0
      %1184 = vmatpush2.bf16.msra.mxu0 0
      %1185 = vmatprep.subr.bf16.mxu0 0
      %1186 = vmatpush2.bf16.msra.mxu0 0
      %1187 = vmatprep.subr.bf16.mxu0 0
      %1188 = vmatpush2.bf16.msra.mxu0 0
      %1189 = vmatprep.mubr.bf16.mxu0 0
      %1190 = vmatmul.mubr.bf16.gmra.mxu0 %v1149
      %v1191 = vpop.f32.mrf.mxu0
      %v1192 = vadd.f32 0.0, %v1191
      %v1193 = vpop.f32.mrf.mxu0
      %v1194 = vpop.f32.mrf.mxu0
      %v1195 = vadd.f32 0.0, %v1194
      %v1196 = vpop.f32.mrf.mxu0
      %1197 = vmatprep.mubr.bf16.mxu0 0
      %1198 = vmatmul.mubr.bf16.gmra.mxu0 %v1150
      %v1199 = vpop.f32.mrf.mxu0
      %v1200 = vadd.f32 0.0, %v1199
      %v1201 = vpop.f32.mrf.mxu0
      %v1202 = vpop.f32.mrf.mxu0
      %v1203 = vadd.f32 0.0, %v1202
      %v1204 = vpop.f32.mrf.mxu0
      %1205 = vmatprep.mubr.bf16.mxu0 0
      %1206 = vmatmul.mubr.bf16.gmra.mxu0 %v1151
      %v1207 = vpop.f32.mrf.mxu0
      %v1208 = vadd.f32 0.0, %v1207
      %v1209 = vpop.f32.mrf.mxu0
      %v1210 = vpop.f32.mrf.mxu0
      %v1211 = vadd.f32 0.0, %v1210
      %v1212 = vpop.f32.mrf.mxu0
      %1213 = vmatprep.mubr.bf16.mxu0 0
      %1214 = vmatmul.mubr.bf16.gmra.mxu0 %v1152
      %v1215 = vpop.f32.mrf.mxu0
      %v1216 = vadd.f32 0.0, %v1215
      %v1217 = vpop.f32.mrf.mxu0
      %v1218 = vpop.f32.mrf.mxu0
      %v1219 = vadd.f32 0.0, %v1218
      %v1220 = vpop.f32.mrf.mxu0
      %1221 = vmatprep.mubr.bf16.mxu0 0
      %1222 = vmatmul.mubr.bf16.gmra.mxu0 %v1153
      %v1223 = vpop.f32.mrf.mxu0
      %v1224 = vadd.f32 0.0, %v1223
      %v1225 = vpop.f32.mrf.mxu0
      %v1226 = vpop.f32.mrf.mxu0
      %v1227 = vadd.f32 0.0, %v1226
      %v1228 = vpop.f32.mrf.mxu0
      %1229 = vmatprep.mubr.bf16.mxu0 0
      %1230 = vmatmul.mubr.bf16.gmra.mxu0 %v1154
      %v1231 = vpop.f32.mrf.mxu0
      %v1232 = vadd.f32 0.0, %v1231
      %v1233 = vpop.f32.mrf.mxu0
      %v1234 = vpop.f32.mrf.mxu0
      %v1235 = vadd.f32 0.0, %v1234
      %v1236 = vpop.f32.mrf.mxu0
      %1237 = vmatprep.mubr.bf16.mxu0 0
      %1238 = vmatmul.mubr.bf16.gmra.mxu0 %v1155
      %v1239 = vpop.f32.mrf.mxu0
      %v1240 = vadd.f32 0.0, %v1239
      %v1241 = vpop.f32.mrf.mxu0
      %v1242 = vpop.f32.mrf.mxu0
      %v1243 = vadd.f32 0.0, %v1242
      %v1244 = vpop.f32.mrf.mxu0
      %1245 = vmatprep.mubr.bf16.mxu0 0
      %1246 = vmatmul.mubr.bf16.gmra.mxu0 %v1156
      %v1247 = vpop.f32.mrf.mxu0
      %v1248 = vadd.f32 0.0, %v1247
      %v1249 = vpop.f32.mrf.mxu0
      %v1250 = vpop.f32.mrf.mxu0
      %v1251 = vadd.f32 0.0, %v1250
      %v1252 = vpop.f32.mrf.mxu0
      %1253 = vdwg.mxu0
      %1255 = vset.pattern.permute.xlu0 0
      %1256 = vperm.xlu0 %1255, %v431
      %v1257 = vpop.permute.xlu0 %1256
      %1260 = vset.pattern.permute.xlu0 0
      %1261 = vperm.xlu0 %1260, %v432
      %v1262 = vpop.permute.xlu0 %1261
      %1265 = vset.pattern.permute.xlu0 0
      %1266 = vperm.xlu0 %1265, %v433
      %v1267 = vpop.permute.xlu0 %1266
      %1270 = vset.pattern.permute.xlu0 0
      %1271 = vperm.xlu0 %1270, %v434
      %v1272 = vpop.permute.xlu0 %1271
      %1275 = vset.pattern.permute.xlu0 0
      %1276 = vperm.xlu0 %1275, %v435
      %v1277 = vpop.permute.xlu0 %1276
      %1280 = vset.pattern.permute.xlu0 0
      %1281 = vperm.xlu0 %1280, %v436
      %v1282 = vpop.permute.xlu0 %1281
      %1285 = vset.pattern.permute.xlu0 0
      %1286 = vperm.xlu0 %1285, %v437
      %v1287 = vpop.permute.xlu0 %1286
      %1290 = vset.pattern.permute.xlu0 0
      %1291 = vperm.xlu0 %1290, %v438
      %v1292 = vpop.permute.xlu0 %1291
      %1295 = vset.pattern.permute.xlu0 0
      %1296 = vperm.xlu0 %1295, %v439
      %v1297 = vpop.permute.xlu0 %1296
      %1300 = vset.pattern.permute.xlu0 0
      %1301 = vperm.xlu0 %1300, %v440
      %v1302 = vpop.permute.xlu0 %1301
      %1305 = vset.pattern.permute.xlu0 0
      %1306 = vperm.xlu0 %1305, %v441
      %v1307 = vpop.permute.xlu0 %1306
      %1310 = vset.pattern.permute.xlu0 0
      %1311 = vperm.xlu0 %1310, %v442
      %v1312 = vpop.permute.xlu0 %1311
      %1315 = vset.pattern.permute.xlu0 0
      %1316 = vperm.xlu0 %1315, %v443
      %v1317 = vpop.permute.xlu0 %1316
      %1320 = vset.pattern.permute.xlu0 0
      %1321 = vperm.xlu0 %1320, %v444
      %v1322 = vpop.permute.xlu0 %1321
      %1325 = vset.pattern.permute.xlu0 0
      %1326 = vperm.xlu0 %1325, %v445
      %v1327 = vpop.permute.xlu0 %1326
      %1330 = vset.pattern.permute.xlu0 0
      %1331 = vperm.xlu0 %1330, %v446
      %v1332 = vpop.permute.xlu0 %1331
      %v1334 = vmul.f32 %v1192, %v1257
      %v1335 = vmul.f32 %v1195, %v1262
      %v1336 = vmul.f32 %v1200, %v1267
      %v1337 = vmul.f32 %v1203, %v1272
      %v1338 = vmul.f32 %v1208, %v1277
      %v1339 = vmul.f32 %v1211, %v1282
      %v1340 = vmul.f32 %v1216, %v1287
      %v1341 = vmul.f32 %v1219, %v1292
      %v1342 = vmul.f32 %v1224, %v1297
      %v1343 = vmul.f32 %v1227, %v1302
      %v1344 = vmul.f32 %v1232, %v1307
      %v1345 = vmul.f32 %v1235, %v1312
      %v1346 = vmul.f32 %v1240, %v1317
      %v1347 = vmul.f32 %v1243, %v1322
      %v1348 = vmul.f32 %v1248, %v1327
      %v1349 = vmul.f32 %v1251, %v1332
      %v1350 = vpack.c.bf16 %v1134, %v1133
      %v1351 = vpack.c.bf16 %v1136, %v1135
      %v1352 = vpack.c.bf16 %v1138, %v1137
      %v1353 = vpack.c.bf16 %v1140, %v1139
      %v1354 = vpack.c.bf16 %v1142, %v1141
      %v1355 = vpack.c.bf16 %v1144, %v1143
      %v1356 = vpack.c.bf16 %v1146, %v1145
      %v1357 = vpack.c.bf16 %v1148, %v1147
      %1358 = vmatprep.subr.bf16.mxu0 0
      %1359 = vmatpush1.bf16.msra.mxu0 %v404
      %1360 = vmatprep.subr.bf16.mxu0 0
      %1361 = vmatpush1.bf16.msra.mxu0 %v403
      %1362 = vmatprep.subr.bf16.mxu0 0
      %1363 = vmatpush1.bf16.msra.mxu0 %v402
      %1364 = vmatprep.subr.bf16.mxu0 0
      %1365 = vmatpush1.bf16.msra.mxu0 %v401
      %1366 = vmatprep.subr.bf16.mxu0 0
      %1367 = vmatpush1.bf16.msra.mxu0 %v400
      %1368 = vmatprep.subr.bf16.mxu0 0
      %1369 = vmatpush1.bf16.msra.mxu0 %v399
      %1370 = vmatprep.subr.bf16.mxu0 0
      %1371 = vmatpush1.bf16.msra.mxu0 %v398
      %1372 = vmatprep.subr.bf16.mxu0 0
      %1373 = vmatpush1.bf16.msra.mxu0 %v397
      %1374 = vmatprep.subr.bf16.mxu0 0
      %1375 = vmatpush2.bf16.msra.mxu0 0
      %1376 = vmatprep.subr.bf16.mxu0 0
      %1377 = vmatpush2.bf16.msra.mxu0 0
      %1378 = vmatprep.subr.bf16.mxu0 0
      %1379 = vmatpush2.bf16.msra.mxu0 0
      %1380 = vmatprep.subr.bf16.mxu0 0
      %1381 = vmatpush2.bf16.msra.mxu0 0
      %1382 = vmatprep.subr.bf16.mxu0 0
      %1383 = vmatpush2.bf16.msra.mxu0 0
      %1384 = vmatprep.subr.bf16.mxu0 0
      %1385 = vmatpush2.bf16.msra.mxu0 0
      %1386 = vmatprep.subr.bf16.mxu0 0
      %1387 = vmatpush2.bf16.msra.mxu0 0
      %1388 = vmatprep.subr.bf16.mxu0 0
      %1389 = vmatpush2.bf16.msra.mxu0 0
      %1390 = vmatprep.mubr.bf16.mxu0 0
      %1391 = vmatmul.mubr.bf16.gmra.mxu0 %v1350
      %v1392 = vpop.f32.mrf.mxu0
      %v1393 = vadd.f32 0.0, %v1392
      %v1394 = vpop.f32.mrf.mxu0
      %v1395 = vpop.f32.mrf.mxu0
      %v1396 = vadd.f32 0.0, %v1395
      %v1397 = vpop.f32.mrf.mxu0
      %1398 = vmatprep.mubr.bf16.mxu0 0
      %1399 = vmatmul.mubr.bf16.gmra.mxu0 %v1351
      %v1400 = vpop.f32.mrf.mxu0
      %v1401 = vadd.f32 0.0, %v1400
      %v1402 = vpop.f32.mrf.mxu0
      %v1403 = vpop.f32.mrf.mxu0
      %v1404 = vadd.f32 0.0, %v1403
      %v1405 = vpop.f32.mrf.mxu0
      %1406 = vmatprep.mubr.bf16.mxu0 0
      %1407 = vmatmul.mubr.bf16.gmra.mxu0 %v1352
      %v1408 = vpop.f32.mrf.mxu0
      %v1409 = vadd.f32 0.0, %v1408
      %v1410 = vpop.f32.mrf.mxu0
      %v1411 = vpop.f32.mrf.mxu0
      %v1412 = vadd.f32 0.0, %v1411
      %v1413 = vpop.f32.mrf.mxu0
      %1414 = vmatprep.mubr.bf16.mxu0 0
      %1415 = vmatmul.mubr.bf16.gmra.mxu0 %v1353
      %v1416 = vpop.f32.mrf.mxu0
      %v1417 = vadd.f32 0.0, %v1416
      %v1418 = vpop.f32.mrf.mxu0
      %v1419 = vpop.f32.mrf.mxu0
      %v1420 = vadd.f32 0.0, %v1419
      %v1421 = vpop.f32.mrf.mxu0
      %1422 = vmatprep.mubr.bf16.mxu0 0
      %1423 = vmatmul.mubr.bf16.gmra.mxu0 %v1354
      %v1424 = vpop.f32.mrf.mxu0
      %v1425 = vadd.f32 0.0, %v1424
      %v1426 = vpop.f32.mrf.mxu0
      %v1427 = vpop.f32.mrf.mxu0
      %v1428 = vadd.f32 0.0, %v1427
      %v1429 = vpop.f32.mrf.mxu0
      %1430 = vmatprep.mubr.bf16.mxu0 0
      %1431 = vmatmul.mubr.bf16.gmra.mxu0 %v1355
      %v1432 = vpop.f32.mrf.mxu0
      %v1433 = vadd.f32 0.0, %v1432
      %v1434 = vpop.f32.mrf.mxu0
      %v1435 = vpop.f32.mrf.mxu0
      %v1436 = vadd.f32 0.0, %v1435
      %v1437 = vpop.f32.mrf.mxu0
      %1438 = vmatprep.mubr.bf16.mxu0 0
      %1439 = vmatmul.mubr.bf16.gmra.mxu0 %v1356
      %v1440 = vpop.f32.mrf.mxu0
      %v1441 = vadd.f32 0.0, %v1440
      %v1442 = vpop.f32.mrf.mxu0
      %v1443 = vpop.f32.mrf.mxu0
      %v1444 = vadd.f32 0.0, %v1443
      %v1445 = vpop.f32.mrf.mxu0
      %1446 = vmatprep.mubr.bf16.mxu0 0
      %1447 = vmatmul.mubr.bf16.gmra.mxu0 %v1357
      %v1448 = vpop.f32.mrf.mxu0
      %v1449 = vadd.f32 0.0, %v1448
      %v1450 = vpop.f32.mrf.mxu0
      %v1451 = vpop.f32.mrf.mxu0
      %v1452 = vadd.f32 0.0, %v1451
      %v1453 = vpop.f32.mrf.mxu0
      %1454 = vdwg.mxu0
      %1456 = vset.pattern.permute.xlu0 0
      %1457 = vperm.xlu0 %1456, %v447
      %v1458 = vpop.permute.xlu0 %1457
      %1461 = vset.pattern.permute.xlu0 0
      %1462 = vperm.xlu0 %1461, %v448
      %v1463 = vpop.permute.xlu0 %1462
      %1466 = vset.pattern.permute.xlu0 0
      %1467 = vperm.xlu0 %1466, %v449
      %v1468 = vpop.permute.xlu0 %1467
      %1471 = vset.pattern.permute.xlu0 0
      %1472 = vperm.xlu0 %1471, %v450
      %v1473 = vpop.permute.xlu0 %1472
      %1476 = vset.pattern.permute.xlu0 0
      %1477 = vperm.xlu0 %1476, %v451
      %v1478 = vpop.permute.xlu0 %1477
      %1481 = vset.pattern.permute.xlu0 0
      %1482 = vperm.xlu0 %1481, %v452
      %v1483 = vpop.permute.xlu0 %1482
      %1486 = vset.pattern.permute.xlu0 0
      %1487 = vperm.xlu0 %1486, %v453
      %v1488 = vpop.permute.xlu0 %1487
      %1491 = vset.pattern.permute.xlu0 0
      %1492 = vperm.xlu0 %1491, %v454
      %v1493 = vpop.permute.xlu0 %1492
      %1496 = vset.pattern.permute.xlu0 0
      %1497 = vperm.xlu0 %1496, %v455
      %v1498 = vpop.permute.xlu0 %1497
      %1501 = vset.pattern.permute.xlu0 0
      %1502 = vperm.xlu0 %1501, %v456
      %v1503 = vpop.permute.xlu0 %1502
      %1506 = vset.pattern.permute.xlu0 0
      %1507 = vperm.xlu0 %1506, %v457
      %v1508 = vpop.permute.xlu0 %1507
      %1511 = vset.pattern.permute.xlu0 0
      %1512 = vperm.xlu0 %1511, %v458
      %v1513 = vpop.permute.xlu0 %1512
      %1516 = vset.pattern.permute.xlu0 0
      %1517 = vperm.xlu0 %1516, %v459
      %v1518 = vpop.permute.xlu0 %1517
      %1521 = vset.pattern.permute.xlu0 0
      %1522 = vperm.xlu0 %1521, %v460
      %v1523 = vpop.permute.xlu0 %1522
      %1526 = vset.pattern.permute.xlu0 0
      %1527 = vperm.xlu0 %1526, %v461
      %v1528 = vpop.permute.xlu0 %1527
      %1531 = vset.pattern.permute.xlu0 0
      %1532 = vperm.xlu0 %1531, %v462
      %v1533 = vpop.permute.xlu0 %1532
      %v1535 = vmul.f32 %v1393, %v1458
      %v1536 = vmul.f32 %v1396, %v1463
      %v1537 = vmul.f32 %v1401, %v1468
      %v1538 = vmul.f32 %v1404, %v1473
      %v1539 = vmul.f32 %v1409, %v1478
      %v1540 = vmul.f32 %v1412, %v1483
      %v1541 = vmul.f32 %v1417, %v1488
      %v1542 = vmul.f32 %v1420, %v1493
      %v1543 = vmul.f32 %v1425, %v1498
      %v1544 = vmul.f32 %v1428, %v1503
      %v1545 = vmul.f32 %v1433, %v1508
      %v1546 = vmul.f32 %v1436, %v1513
      %v1547 = vmul.f32 %v1441, %v1518
      %v1548 = vmul.f32 %v1444, %v1523
      %v1549 = vmul.f32 %v1449, %v1528
      %v1550 = vmul.f32 %v1452, %v1533
      %1551 = vst [vmem:[%s374] sm:$0xff] %v1334
      %1552 = vst [vmem:[%s374 + $0x8] sm:$0xff] %v1335
      %1553 = vst [vmem:[%s374 + $0x10] sm:$0xff] %v1336
      %1554 = vst [vmem:[%s374 + $0x18] sm:$0xff] %v1337
      %1555 = vst [vmem:[%s374 + $0x20] sm:$0xff] %v1338
      %1556 = vst [vmem:[%s374 + $0x28] sm:$0xff] %v1339
      %1557 = vst [vmem:[%s374 + $0x30] sm:$0xff] %v1340
      %1558 = vst [vmem:[%s374 + $0x38] sm:$0xff] %v1341
      %1559 = vst [vmem:[%s374 + $0x40] sm:$0xff] %v1342
      %1560 = vst [vmem:[%s374 + $0x48] sm:$0xff] %v1343
      %1561 = vst [vmem:[%s374 + $0x50] sm:$0xff] %v1344
      %1562 = vst [vmem:[%s374 + $0x58] sm:$0xff] %v1345
      %1563 = vst [vmem:[%s374 + $0x60] sm:$0xff] %v1346
      %1564 = vst [vmem:[%s374 + $0x68] sm:$0xff] %v1347
      %1565 = vst [vmem:[%s374 + $0x70] sm:$0xff] %v1348
      %1566 = vst [vmem:[%s374 + $0x78] sm:$0xff] %v1349
      %1567 = vst [vmem:[%s379] sm:$0xff] %v1535
      %1568 = vst [vmem:[%s379 + $0x8] sm:$0xff] %v1536
      %1569 = vst [vmem:[%s379 + $0x10] sm:$0xff] %v1537
      %1570 = vst [vmem:[%s379 + $0x18] sm:$0xff] %v1538
      %1571 = vst [vmem:[%s379 + $0x20] sm:$0xff] %v1539
      %1572 = vst [vmem:[%s379 + $0x28] sm:$0xff] %v1540
      %1573 = vst [vmem:[%s379 + $0x30] sm:$0xff] %v1541
      %1574 = vst [vmem:[%s379 + $0x38] sm:$0xff] %v1542
      %1575 = vst [vmem:[%s379 + $0x40] sm:$0xff] %v1543
      %1576 = vst [vmem:[%s379 + $0x48] sm:$0xff] %v1544
      %1577 = vst [vmem:[%s379 + $0x50] sm:$0xff] %v1545
      %1578 = vst [vmem:[%s379 + $0x58] sm:$0xff] %v1546
      %1579 = vst [vmem:[%s379 + $0x60] sm:$0xff] %v1547
      %1580 = vst [vmem:[%s379 + $0x68] sm:$0xff] %v1548
      %1581 = vst [vmem:[%s379 + $0x70] sm:$0xff] %v1549
      %1582 = vst [vmem:[%s379 + $0x78] sm:$0xff] %v1550
      %p1583 = scmp.lt.s32.totalorder %s19, 1
      %s1584 = scalar_select %p1583, %s19, 1
      %s1585 = smul.addr %s1584, 16
      %s1586 = smul.addr %s1585, 8
      %s1587 = scalar_lea.vmem %s6, %s1586
      %p1588 = scmp.lt.s32.totalorder %s19, 1
      %s1589 = scalar_select %p1588, %s19, 1
      %s1590 = smul.addr %s1589, 16
      %s1591 = smul.addr %s1590, 8
      %s1592 = scalar_lea.vmem %s7, %s1591
      // Predicated region
      $region45: #{attn_pallas.1} parent=43 // pred_check
        %p1593 = pneg %p193
      $region46: #{attn_pallas.1} parent=43 // pred_check_branch
        %1595 = sbr.rel (%p1593) target = $region48
      $region47: #{attn_pallas.1} parent=43 // pred_region
        _
      $region48: #{attn_pallas.1} parent=43 // pred_fallthru
        _
      // Predicated region
      $region49: #{attn_pallas.1} parent=43 // pred_check
        %p1596 = pneg %p219
      $region50: #{attn_pallas.1} parent=43 // pred_check_branch
        %1598 = sbr.rel (%p1596) target = $region52
      $region51: #{attn_pallas.1} parent=43 // pred_region
        _
      $region52: #{attn_pallas.1} parent=43 // pred_fallthru
        _
    $region44: #{attn_pallas.1} parent=5 // pred_fallthru
      _
    %p1599 = scmp.le.s32.totalorder 2, %s14
    // Predicated region
    $region53: #{attn_pallas.1} parent=5 // pred_check
      %p1600 = pneg %p1599
    $region54: #{attn_pallas.1} parent=5 // pred_check_branch
      %1602 = sbr.rel (%p1600) target = $region56
    $region55: #{attn_pallas.1} parent=5 // pred_region
      %s1603 = ssub.s32 %s14, 2
      // Predicated region
      $region57: #{attn_pallas.1} parent=55 // pred_check
        %p1604 = pneg %p199
      $region58: #{attn_pallas.1} parent=55 // pred_check_branch
        %1606 = sbr.rel (%p1604) target = $region60
      $region59: #{attn_pallas.1} parent=55 // pred_region
        %p1607 = scmp.lt.s32.totalorder %s20, 1
        %s1608 = scalar_select %p1607, %s20, 1
        %s1609 = smul.addr %s1608, 16
        %s1610 = smul.addr %s1609, 8
        %s1611 = scalar_lea.vmem %s6, %s1610
      $region60: #{attn_pallas.1} parent=55 // pred_fallthru
        _
      // Predicated region
      $region61: #{attn_pallas.1} parent=55 // pred_check
        %p1612 = pneg %p225
      $region62: #{attn_pallas.1} parent=55 // pred_check_branch
        %1614 = sbr.rel (%p1612) target = $region64
      $region63: #{attn_pallas.1} parent=55 // pred_region
        %p1615 = scmp.lt.s32.totalorder %s20, 1
        %s1616 = scalar_select %p1615, %s20, 1
        %s1617 = smul.addr %s1616, 16
        %s1618 = smul.addr %s1617, 8
        %s1619 = scalar_lea.vmem %s7, %s1618
      $region64: #{attn_pallas.1} parent=55 // pred_fallthru
        _
    $region56: #{attn_pallas.1} parent=5 // pred_fallthru
      _
  $region6: #{attn_pallas.1} parent=0 // loop_footer
    %s18 = sadd.s32 1, %s14
  $region7: #{attn_pallas.1} parent=0 // loop_footer_branch
    %13 = sbr.rel target = $region3
  $region8: #{attn_pallas.1} parent=0 // loop_exit
    _

</llo_original>
